<compile_context>
chip_gen: v7x
topology: tpu7x:2x2x1
jax: 0.10.0
libtpu: 0.0.40
codegen_flags: <defaults>
</compile_context>

<pallas_src>
import jax
import jax.numpy as jnp
from jax.experimental import pallas as pl
from jax.experimental.pallas import tpu as pltpu

BN_EPS = 1e-5


def _bn_relu(h, gamma, beta):
    """Training-mode BatchNorm1d (biased batch variance) + ReLU, one-pass stats.

    h: (B, F) float32.  gamma/beta: (1, F) float32.
    """
    inv_n = 1.0 / h.shape[0]
    s1 = jnp.sum(h, axis=0, keepdims=True)
    s2 = jnp.sum(h * h, axis=0, keepdims=True)
    mu = s1 * inv_n
    var = jnp.maximum(s2 * inv_n - mu * mu, 0.0)           # clamp f32 roundoff
    scale = gamma * jax.lax.rsqrt(var + BN_EPS)
    shift = beta - mu * scale
    return jnp.maximum(h * scale + shift, 0.0)


def invkin_kernel(x_ref,
                  w1_ref, b1_ref,
                  w2_ref, g2_ref, be2_ref,
                  w3_ref, g3_ref, be3_ref,
                  wp1_ref, gp1_ref, bep1_ref,
                  wout_ref, bout_ref,
                  out_ref):
    bf16 = jnp.bfloat16
    x = x_ref[...].astype(bf16)

    # ---- self.net ----
    h1 = jnp.dot(x, w1_ref[...], preferred_element_type=jnp.float32) + b1_ref[...]
    h1 = jnp.maximum(h1, 0.0)                                          # ReLU

    # pre-BN biases dropped: cancelled exactly by BN mean subtraction
    h2 = jnp.dot(h1.astype(bf16), w2_ref[...], preferred_element_type=jnp.float32)
    h2 = _bn_relu(h2, g2_ref[...], be2_ref[...])                       # BN(512)+ReLU

    h3 = jnp.dot(h2.astype(bf16), w3_ref[...], preferred_element_type=jnp.float32)
    common = _bn_relu(h3, g3_ref[...], be3_ref[...])                   # BN(256)+ReLU

    # ---- self.net_pos (hidden) ----
    hp = jnp.dot(common.astype(bf16), wp1_ref[...], preferred_element_type=jnp.float32)
    hp = _bn_relu(hp, gp1_ref[...], bep1_ref[...])                     # BN(256)+ReLU

    # ---- fused heads: [pos | grip] = tanh([hp | common] @ W_out + b_out) ----
    head_in = jnp.concatenate([hp, common], axis=1).astype(bf16)       # (B, 512)
    out_ref[...] = jnp.tanh(
        jnp.dot(head_in, wout_ref[...], preferred_element_type=jnp.float32)
        + bout_ref[...])                                               # (B, 4)


def invkin_forward(x, params):
    (w1, b1, w2, g2, be2, w3, g3, be3,
     wp1, gp1, bep1, wp2, bp2, wg, bg) = params

    # Pack the two heads into one block-diagonal (512, 4) weight so the kernel
    # issues a single MXU push and writes the concatenated output directly.
    z_pg = jnp.zeros((wp2.shape[0], wg.shape[1]), wp2.dtype)   # (256, 1)
    z_gp = jnp.zeros((wg.shape[0], wp2.shape[1]), wg.dtype)    # (256, 3)
    w_out = jnp.concatenate(
        [jnp.concatenate([wp2, z_pg], axis=1),
         jnp.concatenate([z_gp, wg], axis=1)], axis=0)         # (512, 4) bf16
    b_out = jnp.concatenate([bp2, bg], axis=1)                 # (1, 4) f32

    args = (x, w1, b1, w2, g2, be2, w3, g3, be3, wp1, gp1, bep1, w_out, b_out)
    vmem = pl.BlockSpec(memory_space=pltpu.MemorySpace.VMEM)

    B = x.shape[0]
    return pl.pallas_call(
        invkin_kernel,
        out_shape=jax.ShapeDtypeStruct((B, 4), jnp.float32),
        in_specs=[vmem] * len(args),
        out_specs=vmem,
    )(*args)


def init_params(key, state_dim):
    """Deterministic init.  Linear weights stored as (in, out), bf16.

    Biases feeding BatchNorm layers are omitted (mathematically redundant in
    training-mode BN).  Biases / BN affine params kept in f32.
    """
    dims = [
        ("w1", 2 * state_dim, 512),
        ("w2", 512, 512),
        ("w3", 512, 256),
        ("wp1", 256, 256),
        ("wp2", 256, 3),
        ("wg", 256, 1),
    ]
    keys = jax.random.split(key, len(dims) + 3)
    wk, bk = keys[:len(dims)], keys[len(dims):]

    w = {}
    for k, (name, din, dout) in zip(wk, dims):
        wf = jax.random.normal(k, (din, dout), jnp.float32) / jnp.sqrt(float(din))
        w[name] = wf.astype(jnp.bfloat16)

    b1 = 0.01 * jax.random.normal(bk[0], (1, 512), jnp.float32)
    bp2 = 0.01 * jax.random.normal(bk[1], (1, 3), jnp.float32)
    bg = 0.01 * jax.random.normal(bk[2], (1, 1), jnp.float32)

    def bn(n):  # gamma=1, beta=0 (PyTorch BatchNorm1d init)
        return jnp.ones((1, n), jnp.float32), jnp.zeros((1, n), jnp.float32)

    g2, be2 = bn(512)
    g3, be3 = bn(256)
    gp1, bep1 = bn(256)

    return (w["w1"], b1,
            w["w2"], g2, be2,
            w["w3"], g3, be3,
            w["wp1"], gp1, bep1,
            w["wp2"], bp2, w["wg"], bg)


def invkin_reference(x, params):
    """Pure-JAX f32 reference mirroring the PyTorch forward (training-mode BN).

    Uses the same (bf16-quantized) weights upcast to f32; the two heads are
    kept separate and concatenated exactly as in the PyTorch module.
    """
    (w1, b1, w2, g2, be2, w3, g3, be3,
     wp1, gp1, bep1, wp2, bp2, wg, bg) = params
    f32 = lambda a: a.astype(jnp.float32)

    def bn_relu(h, g, b):
        mu = jnp.mean(h, axis=0, keepdims=True)
        var = jnp.mean((h - mu) ** 2, axis=0, keepdims=True)
        return jnp.maximum((h - mu) * jax.lax.rsqrt(var + BN_EPS) * g + b, 0.0)

    h1 = jnp.maximum(x @ f32(w1) + b1, 0.0)
    h2 = bn_relu(h1 @ f32(w2), g2, be2)          # pre-BN bias cancels under BN
    common = bn_relu(h2 @ f32(w3), g3, be3)
    hp = bn_relu(common @ f32(wp1), gp1, bep1)
    pos = jnp.tanh(hp @ f32(wp2) + bp2)
    grip = jnp.tanh(common @ f32(wg) + bg)
    return jnp.concatenate([pos, grip], axis=1)


if __name__ == "__main__":
    state_dim = 16          # obs dim -> input dim = 2 * state_dim = 32
    batch = 8               # BatchNorm1d (training mode) needs batch > 1

    key = jax.random.PRNGKey(0)
    kx, kp = jax.random.split(key)
    x = jax.random.normal(kx, (batch, 2 * state_dim), jnp.float32)
    params = init_params(kp, state_dim)

    out = invkin_forward(x, params)
    out = jax.block_until_ready(out)

    ref = invkin_reference(x, params)
    assert out.shape == (batch, 4), out.shape
    max_err = float(jnp.max(jnp.abs(out - ref)))
    # Tolerance loosened vs the f32-only version: the kernel casts dot LHS
    # activations to bf16 (weights are already bf16 in both paths).
    assert jnp.allclose(out, ref, atol=5e-2, rtol=5e-2), (
        "mismatch vs reference: max abs err = %e" % max_err)

    print("KERNEL_OK")
</pallas_src>

<mosaic_0001>
module attributes {stable_mosaic.version = 11 : i64} {
  func.func @invkin_kernel(%arg0: memref<8x32xf32, #tpu.memory_space<vmem>>, %arg1: memref<32x512xbf16, #tpu.memory_space<vmem>>, %arg2: memref<1x512xf32, #tpu.memory_space<vmem>>, %arg3: memref<512x512xbf16, #tpu.memory_space<vmem>>, %arg4: memref<1x512xf32, #tpu.memory_space<vmem>>, %arg5: memref<1x512xf32, #tpu.memory_space<vmem>>, %arg6: memref<512x256xbf16, #tpu.memory_space<vmem>>, %arg7: memref<1x256xf32, #tpu.memory_space<vmem>>, %arg8: memref<1x256xf32, #tpu.memory_space<vmem>>, %arg9: memref<256x256xbf16, #tpu.memory_space<vmem>>, %arg10: memref<1x256xf32, #tpu.memory_space<vmem>>, %arg11: memref<1x256xf32, #tpu.memory_space<vmem>>, %arg12: memref<512x4xbf16, #tpu.memory_space<vmem>>, %arg13: memref<1x4xf32, #tpu.memory_space<vmem>>, %arg14: memref<8x4xf32, #tpu.memory_space<vmem>>) attributes {dimension_semantics = [], scalar_prefetch = 0 : i64, scratch_operands = 0 : i64, tpu.core_type = #tpu.core_type<tc>} {
    %c0 = arith.constant 0 : index
    %c0_0 = arith.constant 0 : index
    %0 = vector.load %arg0[%c0, %c0_0] : memref<8x32xf32, #tpu.memory_space<vmem>>, vector<8x32xf32>
    %1 = arith.truncf %0 : vector<8x32xf32> to vector<8x32xbf16>
    %c0_1 = arith.constant 0 : index
    %c0_2 = arith.constant 0 : index
    %2 = vector.load %arg1[%c0_1, %c0_2] : memref<32x512xbf16, #tpu.memory_space<vmem>>, vector<32x512xbf16>
    %cst = arith.constant dense<0.000000e+00> : vector<8x512xf32>
    %3 = tpu.matmul %1, %2, %cst {dimension_numbers = #tpu.dot_dimension_numbers<[1], [0], [0], [1], [0, 0, 1, 1], [], []>} : vector<8x32xbf16>, vector<32x512xbf16>, vector<8x512xf32> -> vector<8x512xf32>
    %c0_3 = arith.constant 0 : index
    %c0_4 = arith.constant 0 : index
    %4 = vector.load %arg2[%c0_3, %c0_4] : memref<1x512xf32, #tpu.memory_space<vmem>>, vector<1x512xf32>
    %5 = vector.broadcast %4 : vector<1x512xf32> to vector<8x512xf32>
    %6 = arith.addf %3, %5 : vector<8x512xf32>
    %cst_5 = arith.constant 0.000000e+00 : f32
    %7 = vector.broadcast %cst_5 : f32 to vector<8x512xf32>
    %8 = arith.maximumf %6, %7 : vector<8x512xf32>
    %9 = arith.truncf %8 : vector<8x512xf32> to vector<8x512xbf16>
    %c0_6 = arith.constant 0 : index
    %c0_7 = arith.constant 0 : index
    %10 = vector.load %arg3[%c0_6, %c0_7] : memref<512x512xbf16, #tpu.memory_space<vmem>>, vector<512x512xbf16>
    %cst_8 = arith.constant dense<0.000000e+00> : vector<8x512xf32>
    %11 = tpu.matmul %9, %10, %cst_8 {dimension_numbers = #tpu.dot_dimension_numbers<[1], [0], [0], [1], [0, 0, 1, 1], [], []>} : vector<8x512xbf16>, vector<512x512xbf16>, vector<8x512xf32> -> vector<8x512xf32>
    %c0_9 = arith.constant 0 : index
    %c0_10 = arith.constant 0 : index
    %12 = vector.load %arg4[%c0_9, %c0_10] : memref<1x512xf32, #tpu.memory_space<vmem>>, vector<1x512xf32>
    %c0_11 = arith.constant 0 : index
    %c0_12 = arith.constant 0 : index
    %13 = vector.load %arg5[%c0_11, %c0_12] : memref<1x512xf32, #tpu.memory_space<vmem>>, vector<1x512xf32>
    %cst_13 = arith.constant dense<0.000000e+00> : vector<512xf32>
    %14 = vector.multi_reduction <add>, %11, %cst_13 [0] : vector<8x512xf32> to vector<512xf32>
    %15 = vector.shape_cast %14 : vector<512xf32> to vector<1x512xf32>
    %16 = arith.mulf %11, %11 : vector<8x512xf32>
    %cst_14 = arith.constant dense<0.000000e+00> : vector<512xf32>
    %17 = vector.multi_reduction <add>, %16, %cst_14 [0] : vector<8x512xf32> to vector<512xf32>
    %18 = vector.shape_cast %17 : vector<512xf32> to vector<1x512xf32>
    %cst_15 = arith.constant 1.250000e-01 : f32
    %19 = vector.broadcast %cst_15 : f32 to vector<1x512xf32>
    %20 = arith.mulf %15, %19 : vector<1x512xf32>
    %cst_16 = arith.constant 1.250000e-01 : f32
    %21 = vector.broadcast %cst_16 : f32 to vector<1x512xf32>
    %22 = arith.mulf %18, %21 : vector<1x512xf32>
    %23 = arith.mulf %20, %20 : vector<1x512xf32>
    %24 = arith.subf %22, %23 : vector<1x512xf32>
    %cst_17 = arith.constant 0.000000e+00 : f32
    %25 = vector.broadcast %cst_17 : f32 to vector<1x512xf32>
    %26 = arith.maximumf %24, %25 : vector<1x512xf32>
    %cst_18 = arith.constant 9.99999974E-6 : f32
    %27 = vector.broadcast %cst_18 : f32 to vector<1x512xf32>
    %28 = arith.addf %26, %27 : vector<1x512xf32>
    %29 = math.rsqrt %28 : vector<1x512xf32>
    %30 = arith.mulf %12, %29 : vector<1x512xf32>
    %31 = arith.mulf %20, %30 : vector<1x512xf32>
    %32 = arith.subf %13, %31 : vector<1x512xf32>
    %33 = vector.broadcast %30 : vector<1x512xf32> to vector<8x512xf32>
    %34 = arith.mulf %11, %33 : vector<8x512xf32>
    %35 = vector.broadcast %32 : vector<1x512xf32> to vector<8x512xf32>
    %36 = arith.addf %34, %35 : vector<8x512xf32>
    %cst_19 = arith.constant 0.000000e+00 : f32
    %37 = vector.broadcast %cst_19 : f32 to vector<8x512xf32>
    %38 = arith.maximumf %36, %37 : vector<8x512xf32>
    %39 = arith.truncf %38 : vector<8x512xf32> to vector<8x512xbf16>
    %c0_20 = arith.constant 0 : index
    %c0_21 = arith.constant 0 : index
    %40 = vector.load %arg6[%c0_20, %c0_21] : memref<512x256xbf16, #tpu.memory_space<vmem>>, vector<512x256xbf16>
    %cst_22 = arith.constant dense<0.000000e+00> : vector<8x256xf32>
    %41 = tpu.matmul %39, %40, %cst_22 {dimension_numbers = #tpu.dot_dimension_numbers<[1], [0], [0], [1], [0, 0, 1, 1], [], []>} : vector<8x512xbf16>, vector<512x256xbf16>, vector<8x256xf32> -> vector<8x256xf32>
    %c0_23 = arith.constant 0 : index
    %c0_24 = arith.constant 0 : index
    %42 = vector.load %arg7[%c0_23, %c0_24] : memref<1x256xf32, #tpu.memory_space<vmem>>, vector<1x256xf32>
    %c0_25 = arith.constant 0 : index
    %c0_26 = arith.constant 0 : index
    %43 = vector.load %arg8[%c0_25, %c0_26] : memref<1x256xf32, #tpu.memory_space<vmem>>, vector<1x256xf32>
    %cst_27 = arith.constant dense<0.000000e+00> : vector<256xf32>
    %44 = vector.multi_reduction <add>, %41, %cst_27 [0] : vector<8x256xf32> to vector<256xf32>
    %45 = vector.shape_cast %44 : vector<256xf32> to vector<1x256xf32>
    %46 = arith.mulf %41, %41 : vector<8x256xf32>
    %cst_28 = arith.constant dense<0.000000e+00> : vector<256xf32>
    %47 = vector.multi_reduction <add>, %46, %cst_28 [0] : vector<8x256xf32> to vector<256xf32>
    %48 = vector.shape_cast %47 : vector<256xf32> to vector<1x256xf32>
    %cst_29 = arith.constant 1.250000e-01 : f32
    %49 = vector.broadcast %cst_29 : f32 to vector<1x256xf32>
    %50 = arith.mulf %45, %49 : vector<1x256xf32>
    %cst_30 = arith.constant 1.250000e-01 : f32
    %51 = vector.broadcast %cst_30 : f32 to vector<1x256xf32>
    %52 = arith.mulf %48, %51 : vector<1x256xf32>
    %53 = arith.mulf %50, %50 : vector<1x256xf32>
    %54 = arith.subf %52, %53 : vector<1x256xf32>
    %cst_31 = arith.constant 0.000000e+00 : f32
    %55 = vector.broadcast %cst_31 : f32 to vector<1x256xf32>
    %56 = arith.maximumf %54, %55 : vector<1x256xf32>
    %cst_32 = arith.constant 9.99999974E-6 : f32
    %57 = vector.broadcast %cst_32 : f32 to vector<1x256xf32>
    %58 = arith.addf %56, %57 : vector<1x256xf32>
    %59 = math.rsqrt %58 : vector<1x256xf32>
    %60 = arith.mulf %42, %59 : vector<1x256xf32>
    %61 = arith.mulf %50, %60 : vector<1x256xf32>
    %62 = arith.subf %43, %61 : vector<1x256xf32>
    %63 = vector.broadcast %60 : vector<1x256xf32> to vector<8x256xf32>
    %64 = arith.mulf %41, %63 : vector<8x256xf32>
    %65 = vector.broadcast %62 : vector<1x256xf32> to vector<8x256xf32>
    %66 = arith.addf %64, %65 : vector<8x256xf32>
    %cst_33 = arith.constant 0.000000e+00 : f32
    %67 = vector.broadcast %cst_33 : f32 to vector<8x256xf32>
    %68 = arith.maximumf %66, %67 : vector<8x256xf32>
    %69 = arith.truncf %68 : vector<8x256xf32> to vector<8x256xbf16>
    %c0_34 = arith.constant 0 : index
    %c0_35 = arith.constant 0 : index
    %70 = vector.load %arg9[%c0_34, %c0_35] : memref<256x256xbf16, #tpu.memory_space<vmem>>, vector<256x256xbf16>
    %cst_36 = arith.constant dense<0.000000e+00> : vector<8x256xf32>
    %71 = tpu.matmul %69, %70, %cst_36 {dimension_numbers = #tpu.dot_dimension_numbers<[1], [0], [0], [1], [0, 0, 1, 1], [], []>} : vector<8x256xbf16>, vector<256x256xbf16>, vector<8x256xf32> -> vector<8x256xf32>
    %c0_37 = arith.constant 0 : index
    %c0_38 = arith.constant 0 : index
    %72 = vector.load %arg10[%c0_37, %c0_38] : memref<1x256xf32, #tpu.memory_space<vmem>>, vector<1x256xf32>
    %c0_39 = arith.constant 0 : index
    %c0_40 = arith.constant 0 : index
    %73 = vector.load %arg11[%c0_39, %c0_40] : memref<1x256xf32, #tpu.memory_space<vmem>>, vector<1x256xf32>
    %cst_41 = arith.constant dense<0.000000e+00> : vector<256xf32>
    %74 = vector.multi_reduction <add>, %71, %cst_41 [0] : vector<8x256xf32> to vector<256xf32>
    %75 = vector.shape_cast %74 : vector<256xf32> to vector<1x256xf32>
    %76 = arith.mulf %71, %71 : vector<8x256xf32>
    %cst_42 = arith.constant dense<0.000000e+00> : vector<256xf32>
    %77 = vector.multi_reduction <add>, %76, %cst_42 [0] : vector<8x256xf32> to vector<256xf32>
    %78 = vector.shape_cast %77 : vector<256xf32> to vector<1x256xf32>
    %cst_43 = arith.constant 1.250000e-01 : f32
    %79 = vector.broadcast %cst_43 : f32 to vector<1x256xf32>
    %80 = arith.mulf %75, %79 : vector<1x256xf32>
    %cst_44 = arith.constant 1.250000e-01 : f32
    %81 = vector.broadcast %cst_44 : f32 to vector<1x256xf32>
    %82 = arith.mulf %78, %81 : vector<1x256xf32>
    %83 = arith.mulf %80, %80 : vector<1x256xf32>
    %84 = arith.subf %82, %83 : vector<1x256xf32>
    %cst_45 = arith.constant 0.000000e+00 : f32
    %85 = vector.broadcast %cst_45 : f32 to vector<1x256xf32>
    %86 = arith.maximumf %84, %85 : vector<1x256xf32>
    %cst_46 = arith.constant 9.99999974E-6 : f32
    %87 = vector.broadcast %cst_46 : f32 to vector<1x256xf32>
    %88 = arith.addf %86, %87 : vector<1x256xf32>
    %89 = math.rsqrt %88 : vector<1x256xf32>
    %90 = arith.mulf %72, %89 : vector<1x256xf32>
    %91 = arith.mulf %80, %90 : vector<1x256xf32>
    %92 = arith.subf %73, %91 : vector<1x256xf32>
    %93 = vector.broadcast %90 : vector<1x256xf32> to vector<8x256xf32>
    %94 = arith.mulf %71, %93 : vector<8x256xf32>
    %95 = vector.broadcast %92 : vector<1x256xf32> to vector<8x256xf32>
    %96 = arith.addf %94, %95 : vector<8x256xf32>
    %cst_47 = arith.constant 0.000000e+00 : f32
    %97 = vector.broadcast %cst_47 : f32 to vector<8x256xf32>
    %98 = arith.maximumf %96, %97 : vector<8x256xf32>
    %99 = tpu.concatenate %98, %68 in 1 : vector<8x256xf32>, vector<8x256xf32> -> vector<8x512xf32>
    %100 = arith.truncf %99 : vector<8x512xf32> to vector<8x512xbf16>
    %c0_48 = arith.constant 0 : index
    %c0_49 = arith.constant 0 : index
    %101 = vector.load %arg12[%c0_48, %c0_49] : memref<512x4xbf16, #tpu.memory_space<vmem>>, vector<512x4xbf16>
    %cst_50 = arith.constant dense<0.000000e+00> : vector<8x4xf32>
    %102 = tpu.matmul %100, %101, %cst_50 {dimension_numbers = #tpu.dot_dimension_numbers<[1], [0], [0], [1], [0, 0, 1, 1], [], []>} : vector<8x512xbf16>, vector<512x4xbf16>, vector<8x4xf32> -> vector<8x4xf32>
    %c0_51 = arith.constant 0 : index
    %c0_52 = arith.constant 0 : index
    %103 = vector.load %arg13[%c0_51, %c0_52] : memref<1x4xf32, #tpu.memory_space<vmem>>, vector<1x4xf32>
    %104 = vector.broadcast %103 : vector<1x4xf32> to vector<8x4xf32>
    %105 = arith.addf %102, %104 : vector<8x4xf32>
    %106 = math.tanh %105 : vector<8x4xf32>
    %c0_53 = arith.constant 0 : index
    %c0_54 = arith.constant 0 : index
    %107 = vector.load %arg14[%c0_53, %c0_54] : memref<8x4xf32, #tpu.memory_space<vmem>>, vector<8x4xf32>
    tpu.vector_store %arg14[%c0_53, %c0_54], %106 {strides = array<i32>} : memref<8x4xf32, #tpu.memory_space<vmem>>, vector<8x4xf32>,
    return
  }
}

</mosaic_0001>

<llo_original>
// kernel: tpu_custom_call.1
$region0: #{tpu_custom_call.1}
  #allocation0 [shape = 'u32[]', space=smem, size = 0x4, offset = 0x4, fixed_abs, tag = 'smem constant byte address 0x4 - core index']
  #allocation1 [shape = 'u32[144,128]{1,0:T(1,128)}', space=vmem, size = 0x12000, scoped, tag = 'internal scratch']
  %s0 = inlined_call_operand.vmem [shape: f32[8,32], index: 0, kind: input, shape index: {}]
  %s1 = inlined_call_operand.hbm [shape: bf16[32,512], index: 1, kind: input, shape index: {}]
  %s2 = inlined_call_operand.vmem [shape: f32[1,512], index: 2, kind: input, shape index: {}]
  %s3 = inlined_call_operand.hbm [shape: bf16[512,512], index: 3, kind: input, shape index: {}]
  %s4 = inlined_call_operand.vmem [shape: f32[1,512], index: 4, kind: input, shape index: {}]
  %s5 = inlined_call_operand.vmem [shape: f32[1,512], index: 5, kind: input, shape index: {}]
  %s6 = inlined_call_operand.hbm [shape: bf16[512,256], index: 6, kind: input, shape index: {}]
  %s7 = inlined_call_operand.vmem [shape: f32[1,256], index: 7, kind: input, shape index: {}]
  %s8 = inlined_call_operand.vmem [shape: f32[1,256], index: 8, kind: input, shape index: {}]
  %s9 = inlined_call_operand.vmem [shape: bf16[256,256], index: 9, kind: input, shape index: {}]
  %s10 = inlined_call_operand.vmem [shape: f32[1,256], index: 10, kind: input, shape index: {}]
  %s11 = inlined_call_operand.vmem [shape: f32[1,256], index: 11, kind: input, shape index: {}]
  %s12 = inlined_call_operand.vmem [shape: bf16[512,4], index: 12, kind: input, shape index: {}]
  %s13 = inlined_call_operand.vmem [shape: f32[1,4], index: 13, kind: input, shape index: {}]
  %s14 = inlined_call_operand.vmem [shape: f32[8,4], index: 14, kind: output, shape index: {}]
  %s15 = sld [smem:[#allocation0]]
  $region78: #{tpu_custom_call.1} parent=0
    _
  %s17 = ssub.s32 1, %s15
  %s18 = scalar_select 0, %s17, %s15
  $region1: #{tpu_custom_call.1} parent=0
    #allocation2 [shape = 'u8[32768]{0}', space=vmem, size = 0x8000, scoped, tag = 'input window, operand 1, single buffered']
    #allocation3 [shape = 's32[1]{0}', space=sflag, size = 0x4, scoped, tag = 'scoped memory for tpu_custom_call.1']
    #allocation4 [shape = 'u8[524288]{0}', space=vmem, size = 0x80000, scoped, tag = 'input window, operand 3, single buffered']
    #allocation5 [shape = 's32[1]{0}', space=sflag, size = 0x4, scoped, tag = 'scoped memory for tpu_custom_call.1']
    #allocation6 [shape = 'u8[262144]{0}', space=vmem, size = 0x40000, scoped, tag = 'input window, operand 6, single buffered']
    %19 = vsyncpa [#allocation3], 0
    %20 = vsyncpa [#allocation5], 0
    // Predicated region
    $region2: #{tpu_custom_call.1} parent=1 // pred_check
      _
    $region3: #{tpu_custom_call.1} parent=1 // pred_check_branch
      %22 = sbr.rel (0) target = $region5
    $region4: #{tpu_custom_call.1} parent=1 // pred_region
      _
    $region5: #{tpu_custom_call.1} parent=1 // pred_fallthru
      _
    // Predicated region
    $region6: #{tpu_custom_call.1} parent=1 // pred_check
      _
    $region7: #{tpu_custom_call.1} parent=1 // pred_check_branch
      %24 = sbr.rel (0) target = $region9
    $region8: #{tpu_custom_call.1} parent=1 // pred_region
      %s26 = ssub.s32 1024, 1024
      %27 = vsyncadd [#allocation3], %s26
      %s28 = sshll.u32 [#allocation2], 4
      %s29 = int_to_ptr.vmem [resolvable:$true] %s28
      %34 = dma.hbm_to_vmem [thread:$0]  %s1, 1024, %s29, [#allocation3], 256, 256, 16
    $region9: #{tpu_custom_call.1} parent=1 // pred_fallthru
      _
    // Predicated region
    $region10: #{tpu_custom_call.1} parent=1 // pred_check
      _
    $region11: #{tpu_custom_call.1} parent=1 // pred_check_branch
      %36 = sbr.rel (0) target = $region13
    $region12: #{tpu_custom_call.1} parent=1 // pred_region
      _
    $region13: #{tpu_custom_call.1} parent=1 // pred_fallthru
      _
    // Predicated region
    $region14: #{tpu_custom_call.1} parent=1 // pred_check
      _
    $region15: #{tpu_custom_call.1} parent=1 // pred_check_branch
      %38 = sbr.rel (0) target = $region17
    $region16: #{tpu_custom_call.1} parent=1 // pred_region
      %s40 = ssub.s32 16384, 16384
      %41 = vsyncadd [#allocation5], %s40
      %s42 = sshll.u32 [#allocation4], 4
      %s43 = int_to_ptr.vmem [resolvable:$true] %s42
      %48 = dma.hbm_to_vmem [thread:$0]  %s3, 16384, %s43, [#allocation5], 256, 256, 16
    $region17: #{tpu_custom_call.1} parent=1 // pred_fallthru
      _
    // Predicated region
    $region18: #{tpu_custom_call.1} parent=1 // pred_check
      _
    $region19: #{tpu_custom_call.1} parent=1 // pred_check_branch
      %50 = sbr.rel (0) target = $region21
    $region20: #{tpu_custom_call.1} parent=1 // pred_region
      _
    $region21: #{tpu_custom_call.1} parent=1 // pred_fallthru
      _
    // Predicated region
    $region22: #{tpu_custom_call.1} parent=1 // pred_check
      _
    $region23: #{tpu_custom_call.1} parent=1 // pred_check_branch
      %52 = sbr.rel (0) target = $region25
    $region24: #{tpu_custom_call.1} parent=1 // pred_region
      _
    $region25: #{tpu_custom_call.1} parent=1 // pred_fallthru
      _
    // Predicated region
    $region26: #{tpu_custom_call.1} parent=1 // pred_check
      _
    $region27: #{tpu_custom_call.1} parent=1 // pred_check_branch
      %54 = sbr.rel (0) target = $region29
    $region28: #{tpu_custom_call.1} parent=1 // pred_region
      %s56 = ssub.s32 8192, 8192
      %57 = vsyncadd [#allocation5], %s56
      %s58 = sshll.u32 [#allocation6], 4
      %s59 = int_to_ptr.vmem [resolvable:$true] %s58
      %64 = dma.hbm_to_vmem [thread:$0]  %s6, 8192, %s59, [#allocation5], 128, 128, 8
    $region29: #{tpu_custom_call.1} parent=1 // pred_fallthru
      _
    // Predicated region
    $region30: #{tpu_custom_call.1} parent=1 // pred_check
      _
    $region31: #{tpu_custom_call.1} parent=1 // pred_check_branch
      %66 = sbr.rel (0) target = $region33
    $region32: #{tpu_custom_call.1} parent=1 // pred_region
      _
    $region33: #{tpu_custom_call.1} parent=1 // pred_fallthru
      _
    // Predicated region
    $region34: #{tpu_custom_call.1} parent=1 // pred_check
      _
    $region35: #{tpu_custom_call.1} parent=1 // pred_check_branch
      %68 = sbr.rel (0) target = $region37
    $region36: #{tpu_custom_call.1} parent=1 // pred_region
      _
    $region37: #{tpu_custom_call.1} parent=1 // pred_fallthru
      _
    // Predicated region
    $region38: #{tpu_custom_call.1} parent=1 // pred_check
      _
    $region39: #{tpu_custom_call.1} parent=1 // pred_check_branch
      %70 = sbr.rel (0) target = $region41
    $region40: #{tpu_custom_call.1} parent=1 // pred_region
      _
    $region41: #{tpu_custom_call.1} parent=1 // pred_fallthru
      _
    // Predicated region
    $region42: #{tpu_custom_call.1} parent=1 // pred_check
      _
    $region43: #{tpu_custom_call.1} parent=1 // pred_check_branch
      %72 = sbr.rel (0) target = $region45
    $region44: #{tpu_custom_call.1} parent=1 // pred_region
      _
    $region45: #{tpu_custom_call.1} parent=1 // pred_fallthru
      _
    // Predicated region
    $region46: #{tpu_custom_call.1} parent=1 // pred_check
      _
    $region47: #{tpu_custom_call.1} parent=1 // pred_check_branch
      %74 = sbr.rel (0) target = $region49
    $region48: #{tpu_custom_call.1} parent=1 // pred_region
      _
    $region49: #{tpu_custom_call.1} parent=1 // pred_fallthru
      _
    // Predicated region
    $region50: #{tpu_custom_call.1} parent=1 // pred_check
      _
    $region51: #{tpu_custom_call.1} parent=1 // pred_check_branch
      %76 = sbr.rel (0) target = $region53
    $region52: #{tpu_custom_call.1} parent=1 // pred_region
      _
    $region53: #{tpu_custom_call.1} parent=1 // pred_fallthru
      _
    // Predicated region
    $region54: #{tpu_custom_call.1} parent=1 // pred_check
      _
    $region55: #{tpu_custom_call.1} parent=1 // pred_check_branch
      %78 = sbr.rel (0) target = $region57
    $region56: #{tpu_custom_call.1} parent=1 // pred_region
      _
    $region57: #{tpu_custom_call.1} parent=1 // pred_fallthru
      _
    // Predicated region
    $region58: #{tpu_custom_call.1} parent=1 // pred_check
      _
    $region59: #{tpu_custom_call.1} parent=1 // pred_check_branch
      %80 = sbr.rel (0) target = $region61
    $region60: #{tpu_custom_call.1} parent=1 // pred_region
      %81 = dma.done [#allocation3], 1024
    $region61: #{tpu_custom_call.1} parent=1 // pred_fallthru
      _
    // Predicated region
    $region62: #{tpu_custom_call.1} parent=1 // pred_check
      _
    $region63: #{tpu_custom_call.1} parent=1 // pred_check_branch
      %83 = sbr.rel (0) target = $region65
    $region64: #{tpu_custom_call.1} parent=1 // pred_region
      %84 = dma.done [#allocation5], 16384
    $region65: #{tpu_custom_call.1} parent=1 // pred_fallthru
      _
    // Predicated region
    $region66: #{tpu_custom_call.1} parent=1 // pred_check
      _
    $region67: #{tpu_custom_call.1} parent=1 // pred_check_branch
      %86 = sbr.rel (0) target = $region69
    $region68: #{tpu_custom_call.1} parent=1 // pred_region
      %87 = dma.done [#allocation5], 8192
    $region69: #{tpu_custom_call.1} parent=1 // pred_fallthru
      _
    %v89 = vld [vmem:[%s0] sm:$0xff]
    %v90 = vpack.c.bf16 %v89, %v89
    %v91 = vld [vmem:[#allocation2] sm:$0xff]
    %v92 = vld [vmem:[#allocation2 + $0x8] sm:$0xff]
    %v93 = vld [vmem:[#allocation2 + $0x10] sm:$0xff]
    %v94 = vld [vmem:[#allocation2 + $0x18] sm:$0xff]
    %v95 = vld [vmem:[#allocation2 + $0x20] sm:$0xff]
    %v96 = vld [vmem:[#allocation2 + $0x28] sm:$0xff]
    %v97 = vld [vmem:[#allocation2 + $0x30] sm:$0xff]
    %v98 = vld [vmem:[#allocation2 + $0x38] sm:$0xff]
    %v99 = vld [vmem:[%s2] sm:$0xf]
    %v101 = vlaneseq
    %v102 = vshrl.u32 %v101, 7
    %v103 = vsub.s32 0, %v102
    %v104 = vrot.slane %v99, %v103
    %v105 = vlaneseq
    %v106 = vshrl.u32 %v105, 7
    %v107 = vsub.s32 1, %v106
    %v108 = vrot.slane %v99, %v107
    %v109 = vlaneseq
    %v110 = vshrl.u32 %v109, 7
    %v111 = vsub.s32 2, %v110
    %v112 = vrot.slane %v99, %v111
    %v113 = vlaneseq
    %v114 = vshrl.u32 %v113, 7
    %v115 = vsub.s32 3, %v114
    %v116 = vrot.slane %v99, %v115
    %v129 = vunpack.c.l.b16 %v91
    %v130 = vunpack.c.h.b16 %v91
    %v131 = vunpack.c.l.b16 %v92
    %v132 = vunpack.c.h.b16 %v92
    %v133 = vunpack.c.l.b16 %v93
    %v134 = vunpack.c.h.b16 %v93
    %v135 = vunpack.c.l.b16 %v94
    %v136 = vunpack.c.h.b16 %v94
    %v137 = vunpack.c.l.b16 %v95
    %v138 = vunpack.c.h.b16 %v95
    %v139 = vunpack.c.l.b16 %v96
    %v140 = vunpack.c.h.b16 %v96
    %v141 = vunpack.c.l.b16 %v97
    %v142 = vunpack.c.h.b16 %v97
    %v143 = vunpack.c.l.b16 %v98
    %v144 = vunpack.c.h.b16 %v98
    %v145 = vpack.c.b16 %v133, %v129
    %v146 = vpack.c.b16 %v134, %v130
    %v147 = vpack.c.b16 %v135, %v131
    %v148 = vpack.c.b16 %v136, %v132
    %v149 = vpack.c.b16 %v141, %v137
    %v150 = vpack.c.b16 %v142, %v138
    %v151 = vpack.c.b16 %v143, %v139
    %v152 = vpack.c.b16 %v144, %v140
    %vm161 = vcmask 261120
    %v163 = vsel %vm161, %v90, 0
    %165 = vmatprep.subr.bf16.mxu0 %v146
    %166 = vmatpush1.bf16.msra.mxu0 %v145
    %167 = vmatprep.subr.bf16.mxu0 %v150
    %168 = vmatpush1.bf16.msra.mxu0 %v149
    %169 = vmatprep.subr.bf16.mxu0 0
    %170 = vmatpush1.bf16.msra.mxu0 0
    %171 = vmatprep.subr.bf16.mxu0 0
    %172 = vmatpush1.bf16.msra.mxu0 0
    %173 = vmatprep.subr.bf16.mxu0 0
    %174 = vmatpush1.bf16.msra.mxu0 0
    %175 = vmatprep.subr.bf16.mxu0 0
    %176 = vmatpush1.bf16.msra.mxu0 0
    %177 = vmatprep.subr.bf16.mxu0 0
    %178 = vmatpush1.bf16.msra.mxu0 0
    %179 = vmatprep.subr.bf16.mxu0 0
    %180 = vmatpush1.bf16.msra.mxu0 0
    %181 = vmatprep.subr.bf16.mxu0 0
    %182 = vmatpush1.bf16.msra.mxu0 0
    %183 = vmatprep.subr.bf16.mxu0 0
    %184 = vmatpush1.bf16.msra.mxu0 0
    %185 = vmatprep.subr.bf16.mxu0 0
    %186 = vmatpush1.bf16.msra.mxu0 0
    %187 = vmatprep.subr.bf16.mxu0 0
    %188 = vmatpush1.bf16.msra.mxu0 0
    %189 = vmatprep.subr.bf16.mxu0 0
    %190 = vmatpush1.bf16.msra.mxu0 0
    %191 = vmatprep.subr.bf16.mxu0 0
    %192 = vmatpush1.bf16.msra.mxu0 0
    %193 = vmatprep.subr.bf16.mxu0 0
    %194 = vmatpush1.bf16.msra.mxu0 0
    %195 = vmatprep.subr.bf16.mxu0 0
    %196 = vmatpush1.bf16.msra.mxu0 0
    %197 = vmatprep.mubr.bf16.mxu0 0
    %198 = vmatmul.mubr.bf16.gmra.mrb[0].mxu0 %v163
    %v199 = vpop.f32.mrb[0].mxu0
    %v200 = vadd.f32 %v104, %v199
    %v201 = vpop.f32.mrb[0].mxu0
    %v202 = vadd.f32 %v108, %v201
    %v203 = vpop.f32.mrb[0].mxu0
    %v204 = vpop.f32.mrb[0].mxu0
    %205 = vdwg.mxu0
    %206 = vmatprep.subr.bf16.mxu0 %v148
    %207 = vmatpush1.bf16.msra.mxu0 %v147
    %208 = vmatprep.subr.bf16.mxu0 %v152
    %209 = vmatpush1.bf16.msra.mxu0 %v151
    %210 = vmatprep.subr.bf16.mxu0 0
    %211 = vmatpush1.bf16.msra.mxu0 0
    %212 = vmatprep.subr.bf16.mxu0 0
    %213 = vmatpush1.bf16.msra.mxu0 0
    %214 = vmatprep.subr.bf16.mxu0 0
    %215 = vmatpush1.bf16.msra.mxu0 0
    %216 = vmatprep.subr.bf16.mxu0 0
    %217 = vmatpush1.bf16.msra.mxu0 0
    %218 = vmatprep.subr.bf16.mxu0 0
    %219 = vmatpush1.bf16.msra.mxu0 0
    %220 = vmatprep.subr.bf16.mxu0 0
    %221 = vmatpush1.bf16.msra.mxu0 0
    %222 = vmatprep.subr.bf16.mxu0 0
    %223 = vmatpush1.bf16.msra.mxu0 0
    %224 = vmatprep.subr.bf16.mxu0 0
    %225 = vmatpush1.bf16.msra.mxu0 0
    %226 = vmatprep.subr.bf16.mxu0 0
    %227 = vmatpush1.bf16.msra.mxu0 0
    %228 = vmatprep.subr.bf16.mxu0 0
    %229 = vmatpush1.bf16.msra.mxu0 0
    %230 = vmatprep.subr.bf16.mxu0 0
    %231 = vmatpush1.bf16.msra.mxu0 0
    %232 = vmatprep.subr.bf16.mxu0 0
    %233 = vmatpush1.bf16.msra.mxu0 0
    %234 = vmatprep.subr.bf16.mxu0 0
    %235 = vmatpush1.bf16.msra.mxu0 0
    %236 = vmatprep.subr.bf16.mxu0 0
    %237 = vmatpush1.bf16.msra.mxu0 0
    %238 = vmatprep.mubr.bf16.mxu0 0
    %239 = vmatmul.mubr.bf16.gmra.mrb[0].mxu0 %v163
    %v240 = vpop.f32.mrb[0].mxu0
    %v241 = vadd.f32 %v112, %v240
    %v242 = vpop.f32.mrb[0].mxu0
    %v243 = vadd.f32 %v116, %v242
    %v244 = vpop.f32.mrb[0].mxu0
    %v245 = vpop.f32.mrb[0].mxu0
    %246 = vdwg.mxu0
    %v247 = vmax.f32 %v200, 0.0
    %v248 = vmax.f32 %v202, 0.0
    %v249 = vmax.f32 %v241, 0.0
    %v250 = vmax.f32 %v243, 0.0
    %v251 = vpack.c.bf16 %v247, %v247
    %v252 = vpack.c.bf16 %v248, %v248
    %v253 = vpack.c.bf16 %v249, %v249
    %v254 = vpack.c.bf16 %v250, %v250
    %v255 = vld [vmem:[#allocation4] sm:$0xff]
    %v256 = vld [vmem:[#allocation4 + $0x8] sm:$0xff]
    %v257 = vld [vmem:[#allocation4 + $0x10] sm:$0xff]
    %v258 = vld [vmem:[#allocation4 + $0x18] sm:$0xff]
    %v259 = vld [vmem:[#allocation4 + $0x20] sm:$0xff]
    %v260 = vld [vmem:[#allocation4 + $0x28] sm:$0xff]
    %v261 = vld [vmem:[#allocation4 + $0x30] sm:$0xff]
    %v262 = vld [vmem:[#allocation4 + $0x38] sm:$0xff]
    %v263 = vld [vmem:[#allocation4 + $0x40] sm:$0xff]
    %v264 = vld [vmem:[#allocation4 + $0x48] sm:$0xff]
    %v265 = vld [vmem:[#allocation4 + $0x50] sm:$0xff]
    %v266 = vld [vmem:[#allocation4 + $0x58] sm:$0xff]
    %v267 = vld [vmem:[#allocation4 + $0x60] sm:$0xff]
    %v268 = vld [vmem:[#allocation4 + $0x68] sm:$0xff]
    %v269 = vld [vmem:[#allocation4 + $0x70] sm:$0xff]
    %v270 = vld [vmem:[#allocation4 + $0x78] sm:$0xff]
    %v271 = vld [vmem:[#allocation4 + $0x80] sm:$0xff]
    %v272 = vld [vmem:[#allocation4 + $0x88] sm:$0xff]
    %v273 = vld [vmem:[#allocation4 + $0x90] sm:$0xff]
    %v274 = vld [vmem:[#allocation4 + $0x98] sm:$0xff]
    %v275 = vld [vmem:[#allocation4 + $0xa0] sm:$0xff]
    %v276 = vld [vmem:[#allocation4 + $0xa8] sm:$0xff]
    %v277 = vld [vmem:[#allocation4 + $0xb0] sm:$0xff]
    %v278 = vld [vmem:[#allocation4 + $0xb8] sm:$0xff]
    %v279 = vld [vmem:[#allocation4 + $0xc0] sm:$0xff]
    %v280 = vld [vmem:[#allocation4 + $0xc8] sm:$0xff]
    %v281 = vld [vmem:[#allocation4 + $0xd0] sm:$0xff]
    %v282 = vld [vmem:[#allocation4 + $0xd8] sm:$0xff]
    %v283 = vld [vmem:[#allocation4 + $0xe0] sm:$0xff]
    %v284 = vld [vmem:[#allocation4 + $0xe8] sm:$0xff]
    %v285 = vld [vmem:[#allocation4 + $0xf0] sm:$0xff]
    %v286 = vld [vmem:[#allocation4 + $0xf8] sm:$0xff]
    %v287 = vld [vmem:[#allocation4 + $0x100] sm:$0xff]
    %v288 = vld [vmem:[#allocation4 + $0x108] sm:$0xff]
    %v289 = vld [vmem:[#allocation4 + $0x110] sm:$0xff]
    %v290 = vld [vmem:[#allocation4 + $0x118] sm:$0xff]
    %v291 = vld [vmem:[#allocation4 + $0x120] sm:$0xff]
    %v292 = vld [vmem:[#allocation4 + $0x128] sm:$0xff]
    %v293 = vld [vmem:[#allocation4 + $0x130] sm:$0xff]
    %v294 = vld [vmem:[#allocation4 + $0x138] sm:$0xff]
    %v295 = vld [vmem:[#allocation4 + $0x140] sm:$0xff]
    %v296 = vld [vmem:[#allocation4 + $0x148] sm:$0xff]
    %v297 = vld [vmem:[#allocation4 + $0x150] sm:$0xff]
    %v298 = vld [vmem:[#allocation4 + $0x158] sm:$0xff]
    %v299 = vld [vmem:[#allocation4 + $0x160] sm:$0xff]
    %v300 = vld [vmem:[#allocation4 + $0x168] sm:$0xff]
    %v301 = vld [vmem:[#allocation4 + $0x170] sm:$0xff]
    %v302 = vld [vmem:[#allocation4 + $0x178] sm:$0xff]
    %v303 = vld [vmem:[#allocation4 + $0x180] sm:$0xff]
    %v304 = vld [vmem:[#allocation4 + $0x188] sm:$0xff]
    %v305 = vld [vmem:[#allocation4 + $0x190] sm:$0xff]
    %v306 = vld [vmem:[#allocation4 + $0x198] sm:$0xff]
    %v307 = vld [vmem:[#allocation4 + $0x1a0] sm:$0xff]
    %v308 = vld [vmem:[#allocation4 + $0x1a8] sm:$0xff]
    %v309 = vld [vmem:[#allocation4 + $0x1b0] sm:$0xff]
    %v310 = vld [vmem:[#allocation4 + $0x1b8] sm:$0xff]
    %v311 = vld [vmem:[#allocation4 + $0x1c0] sm:$0xff]
    %v312 = vld [vmem:[#allocation4 + $0x1c8] sm:$0xff]
    %v313 = vld [vmem:[#allocation4 + $0x1d0] sm:$0xff]
    %v314 = vld [vmem:[#allocation4 + $0x1d8] sm:$0xff]
    %v315 = vld [vmem:[#allocation4 + $0x1e0] sm:$0xff]
    %v316 = vld [vmem:[#allocation4 + $0x1e8] sm:$0xff]
    %v317 = vld [vmem:[#allocation4 + $0x1f0] sm:$0xff]
    %v318 = vld [vmem:[#allocation4 + $0x1f8] sm:$0xff]
    %v319 = vld [vmem:[#allocation4 + $0x200] sm:$0xff]
    %v320 = vld [vmem:[#allocation4 + $0x208] sm:$0xff]
    %v321 = vld [vmem:[#allocation4 + $0x210] sm:$0xff]
    %v322 = vld [vmem:[#allocation4 + $0x218] sm:$0xff]
    %v323 = vld [vmem:[#allocation4 + $0x220] sm:$0xff]
    %v324 = vld [vmem:[#allocation4 + $0x228] sm:$0xff]
    %v325 = vld [vmem:[#allocation4 + $0x230] sm:$0xff]
    %v326 = vld [vmem:[#allocation4 + $0x238] sm:$0xff]
    %v327 = vld [vmem:[#allocation4 + $0x240] sm:$0xff]
    %v328 = vld [vmem:[#allocation4 + $0x248] sm:$0xff]
    %v329 = vld [vmem:[#allocation4 + $0x250] sm:$0xff]
    %v330 = vld [vmem:[#allocation4 + $0x258] sm:$0xff]
    %v331 = vld [vmem:[#allocation4 + $0x260] sm:$0xff]
    %v332 = vld [vmem:[#allocation4 + $0x268] sm:$0xff]
    %v333 = vld [vmem:[#allocation4 + $0x270] sm:$0xff]
    %v334 = vld [vmem:[#allocation4 + $0x278] sm:$0xff]
    %v335 = vld [vmem:[#allocation4 + $0x280] sm:$0xff]
    %v336 = vld [vmem:[#allocation4 + $0x288] sm:$0xff]
    %v337 = vld [vmem:[#allocation4 + $0x290] sm:$0xff]
    %v338 = vld [vmem:[#allocation4 + $0x298] sm:$0xff]
    %v339 = vld [vmem:[#allocation4 + $0x2a0] sm:$0xff]
    %v340 = vld [vmem:[#allocation4 + $0x2a8] sm:$0xff]
    %v341 = vld [vmem:[#allocation4 + $0x2b0] sm:$0xff]
    %v342 = vld [vmem:[#allocation4 + $0x2b8] sm:$0xff]
    %v343 = vld [vmem:[#allocation4 + $0x2c0] sm:$0xff]
    %v344 = vld [vmem:[#allocation4 + $0x2c8] sm:$0xff]
    %v345 = vld [vmem:[#allocation4 + $0x2d0] sm:$0xff]
    %v346 = vld [vmem:[#allocation4 + $0x2d8] sm:$0xff]
    %v347 = vld [vmem:[#allocation4 + $0x2e0] sm:$0xff]
    %v348 = vld [vmem:[#allocation4 + $0x2e8] sm:$0xff]
    %v349 = vld [vmem:[#allocation4 + $0x2f0] sm:$0xff]
    %v350 = vld [vmem:[#allocation4 + $0x2f8] sm:$0xff]
    %v351 = vld [vmem:[#allocation4 + $0x300] sm:$0xff]
    %v352 = vld [vmem:[#allocation4 + $0x308] sm:$0xff]
    %v353 = vld [vmem:[#allocation4 + $0x310] sm:$0xff]
    %v354 = vld [vmem:[#allocation4 + $0x318] sm:$0xff]
    %v355 = vld [vmem:[#allocation4 + $0x320] sm:$0xff]
    %v356 = vld [vmem:[#allocation4 + $0x328] sm:$0xff]
    %v357 = vld [vmem:[#allocation4 + $0x330] sm:$0xff]
    %v358 = vld [vmem:[#allocation4 + $0x338] sm:$0xff]
    %v359 = vld [vmem:[#allocation4 + $0x340] sm:$0xff]
    %v360 = vld [vmem:[#allocation4 + $0x348] sm:$0xff]
    %v361 = vld [vmem:[#allocation4 + $0x350] sm:$0xff]
    %v362 = vld [vmem:[#allocation4 + $0x358] sm:$0xff]
    %v363 = vld [vmem:[#allocation4 + $0x360] sm:$0xff]
    %v364 = vld [vmem:[#allocation4 + $0x368] sm:$0xff]
    %v365 = vld [vmem:[#allocation4 + $0x370] sm:$0xff]
    %v366 = vld [vmem:[#allocation4 + $0x378] sm:$0xff]
    %v367 = vld [vmem:[#allocation4 + $0x380] sm:$0xff]
    %v368 = vld [vmem:[#allocation4 + $0x388] sm:$0xff]
    %v369 = vld [vmem:[#allocation4 + $0x390] sm:$0xff]
    %v370 = vld [vmem:[#allocation4 + $0x398] sm:$0xff]
    %v371 = vld [vmem:[#allocation4 + $0x3a0] sm:$0xff]
    %v372 = vld [vmem:[#allocation4 + $0x3a8] sm:$0xff]
    %v373 = vld [vmem:[#allocation4 + $0x3b0] sm:$0xff]
    %v374 = vld [vmem:[#allocation4 + $0x3b8] sm:$0xff]
    %v375 = vld [vmem:[#allocation4 + $0x3c0] sm:$0xff]
    %v376 = vld [vmem:[#allocation4 + $0x3c8] sm:$0xff]
    %v377 = vld [vmem:[#allocation4 + $0x3d0] sm:$0xff]
    %v378 = vld [vmem:[#allocation4 + $0x3d8] sm:$0xff]
    %v379 = vld [vmem:[#allocation4 + $0x3e0] sm:$0xff]
    %v380 = vld [vmem:[#allocation4 + $0x3e8] sm:$0xff]
    %v381 = vld [vmem:[#allocation4 + $0x3f0] sm:$0xff]
    %v382 = vld [vmem:[#allocation4 + $0x3f8] sm:$0xff]
    %v511 = vunpack.c.l.b16 %v255
    %v512 = vunpack.c.h.b16 %v255
    %v513 = vunpack.c.l.b16 %v256
    %v514 = vunpack.c.h.b16 %v256
    %v515 = vunpack.c.l.b16 %v257
    %v516 = vunpack.c.h.b16 %v257
    %v517 = vunpack.c.l.b16 %v258
    %v518 = vunpack.c.h.b16 %v258
    %v519 = vunpack.c.l.b16 %v259
    %v520 = vunpack.c.h.b16 %v259
    %v521 = vunpack.c.l.b16 %v260
    %v522 = vunpack.c.h.b16 %v260
    %v523 = vunpack.c.l.b16 %v261
    %v524 = vunpack.c.h.b16 %v261
    %v525 = vunpack.c.l.b16 %v262
    %v526 = vunpack.c.h.b16 %v262
    %v527 = vunpack.c.l.b16 %v263
    %v528 = vunpack.c.h.b16 %v263
    %v529 = vunpack.c.l.b16 %v264
    %v530 = vunpack.c.h.b16 %v264
    %v531 = vunpack.c.l.b16 %v265
    %v532 = vunpack.c.h.b16 %v265
    %v533 = vunpack.c.l.b16 %v266
    %v534 = vunpack.c.h.b16 %v266
    %v535 = vunpack.c.l.b16 %v267
    %v536 = vunpack.c.h.b16 %v267
    %v537 = vunpack.c.l.b16 %v268
    %v538 = vunpack.c.h.b16 %v268
    %v539 = vunpack.c.l.b16 %v269
    %v540 = vunpack.c.h.b16 %v269
    %v541 = vunpack.c.l.b16 %v270
    %v542 = vunpack.c.h.b16 %v270
    %v543 = vunpack.c.l.b16 %v271
    %v544 = vunpack.c.h.b16 %v271
    %v545 = vunpack.c.l.b16 %v272
    %v546 = vunpack.c.h.b16 %v272
    %v547 = vunpack.c.l.b16 %v273
    %v548 = vunpack.c.h.b16 %v273
    %v549 = vunpack.c.l.b16 %v274
    %v550 = vunpack.c.h.b16 %v274
    %v551 = vunpack.c.l.b16 %v275
    %v552 = vunpack.c.h.b16 %v275
    %v553 = vunpack.c.l.b16 %v276
    %v554 = vunpack.c.h.b16 %v276
    %v555 = vunpack.c.l.b16 %v277
    %v556 = vunpack.c.h.b16 %v277
    %v557 = vunpack.c.l.b16 %v278
    %v558 = vunpack.c.h.b16 %v278
    %v559 = vunpack.c.l.b16 %v279
    %v560 = vunpack.c.h.b16 %v279
    %v561 = vunpack.c.l.b16 %v280
    %v562 = vunpack.c.h.b16 %v280
    %v563 = vunpack.c.l.b16 %v281
    %v564 = vunpack.c.h.b16 %v281
    %v565 = vunpack.c.l.b16 %v282
    %v566 = vunpack.c.h.b16 %v282
    %v567 = vunpack.c.l.b16 %v283
    %v568 = vunpack.c.h.b16 %v283
    %v569 = vunpack.c.l.b16 %v284
    %v570 = vunpack.c.h.b16 %v284
    %v571 = vunpack.c.l.b16 %v285
    %v572 = vunpack.c.h.b16 %v285
    %v573 = vunpack.c.l.b16 %v286
    %v574 = vunpack.c.h.b16 %v286
    %v575 = vunpack.c.l.b16 %v287
    %v576 = vunpack.c.h.b16 %v287
    %v577 = vunpack.c.l.b16 %v288
    %v578 = vunpack.c.h.b16 %v288
    %v579 = vunpack.c.l.b16 %v289
    %v580 = vunpack.c.h.b16 %v289
    %v581 = vunpack.c.l.b16 %v290
    %v582 = vunpack.c.h.b16 %v290
    %v583 = vunpack.c.l.b16 %v291
    %v584 = vunpack.c.h.b16 %v291
    %v585 = vunpack.c.l.b16 %v292
    %v586 = vunpack.c.h.b16 %v292
    %v587 = vunpack.c.l.b16 %v293
    %v588 = vunpack.c.h.b16 %v293
    %v589 = vunpack.c.l.b16 %v294
    %v590 = vunpack.c.h.b16 %v294
    %v591 = vunpack.c.l.b16 %v295
    %v592 = vunpack.c.h.b16 %v295
    %v593 = vunpack.c.l.b16 %v296
    %v594 = vunpack.c.h.b16 %v296
    %v595 = vunpack.c.l.b16 %v297
    %v596 = vunpack.c.h.b16 %v297
    %v597 = vunpack.c.l.b16 %v298
    %v598 = vunpack.c.h.b16 %v298
    %v599 = vunpack.c.l.b16 %v299
    %v600 = vunpack.c.h.b16 %v299
    %v601 = vunpack.c.l.b16 %v300
    %v602 = vunpack.c.h.b16 %v300
    %v603 = vunpack.c.l.b16 %v301
    %v604 = vunpack.c.h.b16 %v301
    %v605 = vunpack.c.l.b16 %v302
    %v606 = vunpack.c.h.b16 %v302
    %v607 = vunpack.c.l.b16 %v303
    %v608 = vunpack.c.h.b16 %v303
    %v609 = vunpack.c.l.b16 %v304
    %v610 = vunpack.c.h.b16 %v304
    %v611 = vunpack.c.l.b16 %v305
    %v612 = vunpack.c.h.b16 %v305
    %v613 = vunpack.c.l.b16 %v306
    %v614 = vunpack.c.h.b16 %v306
    %v615 = vunpack.c.l.b16 %v307
    %v616 = vunpack.c.h.b16 %v307
    %v617 = vunpack.c.l.b16 %v308
    %v618 = vunpack.c.h.b16 %v308
    %v619 = vunpack.c.l.b16 %v309
    %v620 = vunpack.c.h.b16 %v309
    %v621 = vunpack.c.l.b16 %v310
    %v622 = vunpack.c.h.b16 %v310
    %v623 = vunpack.c.l.b16 %v311
    %v624 = vunpack.c.h.b16 %v311
    %v625 = vunpack.c.l.b16 %v312
    %v626 = vunpack.c.h.b16 %v312
    %v627 = vunpack.c.l.b16 %v313
    %v628 = vunpack.c.h.b16 %v313
    %v629 = vunpack.c.l.b16 %v314
    %v630 = vunpack.c.h.b16 %v314
    %v631 = vunpack.c.l.b16 %v315
    %v632 = vunpack.c.h.b16 %v315
    %v633 = vunpack.c.l.b16 %v316
    %v634 = vunpack.c.h.b16 %v316
    %v635 = vunpack.c.l.b16 %v317
    %v636 = vunpack.c.h.b16 %v317
    %v637 = vunpack.c.l.b16 %v318
    %v638 = vunpack.c.h.b16 %v318
    %v639 = vunpack.c.l.b16 %v319
    %v640 = vunpack.c.h.b16 %v319
    %v641 = vunpack.c.l.b16 %v320
    %v642 = vunpack.c.h.b16 %v320
    %v643 = vunpack.c.l.b16 %v321
    %v644 = vunpack.c.h.b16 %v321
    %v645 = vunpack.c.l.b16 %v322
    %v646 = vunpack.c.h.b16 %v322
    %v647 = vunpack.c.l.b16 %v323
    %v648 = vunpack.c.h.b16 %v323
    %v649 = vunpack.c.l.b16 %v324
    %v650 = vunpack.c.h.b16 %v324
    %v651 = vunpack.c.l.b16 %v325
    %v652 = vunpack.c.h.b16 %v325
    %v653 = vunpack.c.l.b16 %v326
    %v654 = vunpack.c.h.b16 %v326
    %v655 = vunpack.c.l.b16 %v327
    %v656 = vunpack.c.h.b16 %v327
    %v657 = vunpack.c.l.b16 %v328
    %v658 = vunpack.c.h.b16 %v328
    %v659 = vunpack.c.l.b16 %v329
    %v660 = vunpack.c.h.b16 %v329
    %v661 = vunpack.c.l.b16 %v330
    %v662 = vunpack.c.h.b16 %v330
    %v663 = vunpack.c.l.b16 %v331
    %v664 = vunpack.c.h.b16 %v331
    %v665 = vunpack.c.l.b16 %v332
    %v666 = vunpack.c.h.b16 %v332
    %v667 = vunpack.c.l.b16 %v333
    %v668 = vunpack.c.h.b16 %v333
    %v669 = vunpack.c.l.b16 %v334
    %v670 = vunpack.c.h.b16 %v334
    %v671 = vunpack.c.l.b16 %v335
    %v672 = vunpack.c.h.b16 %v335
    %v673 = vunpack.c.l.b16 %v336
    %v674 = vunpack.c.h.b16 %v336
    %v675 = vunpack.c.l.b16 %v337
    %v676 = vunpack.c.h.b16 %v337
    %v677 = vunpack.c.l.b16 %v338
    %v678 = vunpack.c.h.b16 %v338
    %v679 = vunpack.c.l.b16 %v339
    %v680 = vunpack.c.h.b16 %v339
    %v681 = vunpack.c.l.b16 %v340
    %v682 = vunpack.c.h.b16 %v340
    %v683 = vunpack.c.l.b16 %v341
    %v684 = vunpack.c.h.b16 %v341
    %v685 = vunpack.c.l.b16 %v342
    %v686 = vunpack.c.h.b16 %v342
    %v687 = vunpack.c.l.b16 %v343
    %v688 = vunpack.c.h.b16 %v343
    %v689 = vunpack.c.l.b16 %v344
    %v690 = vunpack.c.h.b16 %v344
    %v691 = vunpack.c.l.b16 %v345
    %v692 = vunpack.c.h.b16 %v345
    %v693 = vunpack.c.l.b16 %v346
    %v694 = vunpack.c.h.b16 %v346
    %v695 = vunpack.c.l.b16 %v347
    %v696 = vunpack.c.h.b16 %v347
    %v697 = vunpack.c.l.b16 %v348
    %v698 = vunpack.c.h.b16 %v348
    %v699 = vunpack.c.l.b16 %v349
    %v700 = vunpack.c.h.b16 %v349
    %v701 = vunpack.c.l.b16 %v350
    %v702 = vunpack.c.h.b16 %v350
    %v703 = vunpack.c.l.b16 %v351
    %v704 = vunpack.c.h.b16 %v351
    %v705 = vunpack.c.l.b16 %v352
    %v706 = vunpack.c.h.b16 %v352
    %v707 = vunpack.c.l.b16 %v353
    %v708 = vunpack.c.h.b16 %v353
    %v709 = vunpack.c.l.b16 %v354
    %v710 = vunpack.c.h.b16 %v354
    %v711 = vunpack.c.l.b16 %v355
    %v712 = vunpack.c.h.b16 %v355
    %v713 = vunpack.c.l.b16 %v356
    %v714 = vunpack.c.h.b16 %v356
    %v715 = vunpack.c.l.b16 %v357
    %v716 = vunpack.c.h.b16 %v357
    %v717 = vunpack.c.l.b16 %v358
    %v718 = vunpack.c.h.b16 %v358
    %v719 = vunpack.c.l.b16 %v359
    %v720 = vunpack.c.h.b16 %v359
    %v721 = vunpack.c.l.b16 %v360
    %v722 = vunpack.c.h.b16 %v360
    %v723 = vunpack.c.l.b16 %v361
    %v724 = vunpack.c.h.b16 %v361
    %v725 = vunpack.c.l.b16 %v362
    %v726 = vunpack.c.h.b16 %v362
    %v727 = vunpack.c.l.b16 %v363
    %v728 = vunpack.c.h.b16 %v363
    %v729 = vunpack.c.l.b16 %v364
    %v730 = vunpack.c.h.b16 %v364
    %v731 = vunpack.c.l.b16 %v365
    %v732 = vunpack.c.h.b16 %v365
    %v733 = vunpack.c.l.b16 %v366
    %v734 = vunpack.c.h.b16 %v366
    %v735 = vunpack.c.l.b16 %v367
    %v736 = vunpack.c.h.b16 %v367
    %v737 = vunpack.c.l.b16 %v368
    %v738 = vunpack.c.h.b16 %v368
    %v739 = vunpack.c.l.b16 %v369
    %v740 = vunpack.c.h.b16 %v369
    %v741 = vunpack.c.l.b16 %v370
    %v742 = vunpack.c.h.b16 %v370
    %v743 = vunpack.c.l.b16 %v371
    %v744 = vunpack.c.h.b16 %v371
    %v745 = vunpack.c.l.b16 %v372
    %v746 = vunpack.c.h.b16 %v372
    %v747 = vunpack.c.l.b16 %v373
    %v748 = vunpack.c.h.b16 %v373
    %v749 = vunpack.c.l.b16 %v374
    %v750 = vunpack.c.h.b16 %v374
    %v751 = vunpack.c.l.b16 %v375
    %v752 = vunpack.c.h.b16 %v375
    %v753 = vunpack.c.l.b16 %v376
    %v754 = vunpack.c.h.b16 %v376
    %v755 = vunpack.c.l.b16 %v377
    %v756 = vunpack.c.h.b16 %v377
    %v757 = vunpack.c.l.b16 %v378
    %v758 = vunpack.c.h.b16 %v378
    %v759 = vunpack.c.l.b16 %v379
    %v760 = vunpack.c.h.b16 %v379
    %v761 = vunpack.c.l.b16 %v380
    %v762 = vunpack.c.h.b16 %v380
    %v763 = vunpack.c.l.b16 %v381
    %v764 = vunpack.c.h.b16 %v381
    %v765 = vunpack.c.l.b16 %v382
    %v766 = vunpack.c.h.b16 %v382
    %v767 = vpack.c.b16 %v515, %v511
    %v768 = vpack.c.b16 %v516, %v512
    %v769 = vpack.c.b16 %v517, %v513
    %v770 = vpack.c.b16 %v518, %v514
    %v771 = vpack.c.b16 %v523, %v519
    %v772 = vpack.c.b16 %v524, %v520
    %v773 = vpack.c.b16 %v525, %v521
    %v774 = vpack.c.b16 %v526, %v522
    %v775 = vpack.c.b16 %v531, %v527
    %v776 = vpack.c.b16 %v532, %v528
    %v777 = vpack.c.b16 %v533, %v529
    %v778 = vpack.c.b16 %v534, %v530
    %v779 = vpack.c.b16 %v539, %v535
    %v780 = vpack.c.b16 %v540, %v536
    %v781 = vpack.c.b16 %v541, %v537
    %v782 = vpack.c.b16 %v542, %v538
    %v783 = vpack.c.b16 %v547, %v543
    %v784 = vpack.c.b16 %v548, %v544
    %v785 = vpack.c.b16 %v549, %v545
    %v786 = vpack.c.b16 %v550, %v546
    %v787 = vpack.c.b16 %v555, %v551
    %v788 = vpack.c.b16 %v556, %v552
    %v789 = vpack.c.b16 %v557, %v553
    %v790 = vpack.c.b16 %v558, %v554
    %v791 = vpack.c.b16 %v563, %v559
    %v792 = vpack.c.b16 %v564, %v560
    %v793 = vpack.c.b16 %v565, %v561
    %v794 = vpack.c.b16 %v566, %v562
    %v795 = vpack.c.b16 %v571, %v567
    %v796 = vpack.c.b16 %v572, %v568
    %v797 = vpack.c.b16 %v573, %v569
    %v798 = vpack.c.b16 %v574, %v570
    %v799 = vpack.c.b16 %v579, %v575
    %v800 = vpack.c.b16 %v580, %v576
    %v801 = vpack.c.b16 %v581, %v577
    %v802 = vpack.c.b16 %v582, %v578
    %v803 = vpack.c.b16 %v587, %v583
    %v804 = vpack.c.b16 %v588, %v584
    %v805 = vpack.c.b16 %v589, %v585
    %v806 = vpack.c.b16 %v590, %v586
    %v807 = vpack.c.b16 %v595, %v591
    %v808 = vpack.c.b16 %v596, %v592
    %v809 = vpack.c.b16 %v597, %v593
    %v810 = vpack.c.b16 %v598, %v594
    %v811 = vpack.c.b16 %v603, %v599
    %v812 = vpack.c.b16 %v604, %v600
    %v813 = vpack.c.b16 %v605, %v601
    %v814 = vpack.c.b16 %v606, %v602
    %v815 = vpack.c.b16 %v611, %v607
    %v816 = vpack.c.b16 %v612, %v608
    %v817 = vpack.c.b16 %v613, %v609
    %v818 = vpack.c.b16 %v614, %v610
    %v819 = vpack.c.b16 %v619, %v615
    %v820 = vpack.c.b16 %v620, %v616
    %v821 = vpack.c.b16 %v621, %v617
    %v822 = vpack.c.b16 %v622, %v618
    %v823 = vpack.c.b16 %v627, %v623
    %v824 = vpack.c.b16 %v628, %v624
    %v825 = vpack.c.b16 %v629, %v625
    %v826 = vpack.c.b16 %v630, %v626
    %v827 = vpack.c.b16 %v635, %v631
    %v828 = vpack.c.b16 %v636, %v632
    %v829 = vpack.c.b16 %v637, %v633
    %v830 = vpack.c.b16 %v638, %v634
    %v831 = vpack.c.b16 %v643, %v639
    %v832 = vpack.c.b16 %v644, %v640
    %v833 = vpack.c.b16 %v645, %v641
    %v834 = vpack.c.b16 %v646, %v642
    %v835 = vpack.c.b16 %v651, %v647
    %v836 = vpack.c.b16 %v652, %v648
    %v837 = vpack.c.b16 %v653, %v649
    %v838 = vpack.c.b16 %v654, %v650
    %v839 = vpack.c.b16 %v659, %v655
    %v840 = vpack.c.b16 %v660, %v656
    %v841 = vpack.c.b16 %v661, %v657
    %v842 = vpack.c.b16 %v662, %v658
    %v843 = vpack.c.b16 %v667, %v663
    %v844 = vpack.c.b16 %v668, %v664
    %v845 = vpack.c.b16 %v669, %v665
    %v846 = vpack.c.b16 %v670, %v666
    %v847 = vpack.c.b16 %v675, %v671
    %v848 = vpack.c.b16 %v676, %v672
    %v849 = vpack.c.b16 %v677, %v673
    %v850 = vpack.c.b16 %v678, %v674
    %v851 = vpack.c.b16 %v683, %v679
    %v852 = vpack.c.b16 %v684, %v680
    %v853 = vpack.c.b16 %v685, %v681
    %v854 = vpack.c.b16 %v686, %v682
    %v855 = vpack.c.b16 %v691, %v687
    %v856 = vpack.c.b16 %v692, %v688
    %v857 = vpack.c.b16 %v693, %v689
    %v858 = vpack.c.b16 %v694, %v690
    %v859 = vpack.c.b16 %v699, %v695
    %v860 = vpack.c.b16 %v700, %v696
    %v861 = vpack.c.b16 %v701, %v697
    %v862 = vpack.c.b16 %v702, %v698
    %v863 = vpack.c.b16 %v707, %v703
    %v864 = vpack.c.b16 %v708, %v704
    %v865 = vpack.c.b16 %v709, %v705
    %v866 = vpack.c.b16 %v710, %v706
    %v867 = vpack.c.b16 %v715, %v711
    %v868 = vpack.c.b16 %v716, %v712
    %v869 = vpack.c.b16 %v717, %v713
    %v870 = vpack.c.b16 %v718, %v714
    %v871 = vpack.c.b16 %v723, %v719
    %v872 = vpack.c.b16 %v724, %v720
    %v873 = vpack.c.b16 %v725, %v721
    %v874 = vpack.c.b16 %v726, %v722
    %v875 = vpack.c.b16 %v731, %v727
    %v876 = vpack.c.b16 %v732, %v728
    %v877 = vpack.c.b16 %v733, %v729
    %v878 = vpack.c.b16 %v734, %v730
    %v879 = vpack.c.b16 %v739, %v735
    %v880 = vpack.c.b16 %v740, %v736
    %v881 = vpack.c.b16 %v741, %v737
    %v882 = vpack.c.b16 %v742, %v738
    %v883 = vpack.c.b16 %v747, %v743
    %v884 = vpack.c.b16 %v748, %v744
    %v885 = vpack.c.b16 %v749, %v745
    %v886 = vpack.c.b16 %v750, %v746
    %v887 = vpack.c.b16 %v755, %v751
    %v888 = vpack.c.b16 %v756, %v752
    %v889 = vpack.c.b16 %v757, %v753
    %v890 = vpack.c.b16 %v758, %v754
    %v891 = vpack.c.b16 %v763, %v759
    %v892 = vpack.c.b16 %v764, %v760
    %v893 = vpack.c.b16 %v765, %v761
    %v894 = vpack.c.b16 %v766, %v762
    %1023 = vmatprep.subr.bf16.mxu0 %v768
    %1024 = vmatpush1.bf16.msra.mxu0 %v767
    %1025 = vmatprep.subr.bf16.mxu0 %v772
    %1026 = vmatpush1.bf16.msra.mxu0 %v771
    %1027 = vmatprep.subr.bf16.mxu0 %v776
    %1028 = vmatpush1.bf16.msra.mxu0 %v775
    %1029 = vmatprep.subr.bf16.mxu0 %v780
    %1030 = vmatpush1.bf16.msra.mxu0 %v779
    %1031 = vmatprep.subr.bf16.mxu0 %v784
    %1032 = vmatpush1.bf16.msra.mxu0 %v783
    %1033 = vmatprep.subr.bf16.mxu0 %v788
    %1034 = vmatpush1.bf16.msra.mxu0 %v787
    %1035 = vmatprep.subr.bf16.mxu0 %v792
    %1036 = vmatpush1.bf16.msra.mxu0 %v791
    %1037 = vmatprep.subr.bf16.mxu0 %v796
    %1038 = vmatpush1.bf16.msra.mxu0 %v795
    %1039 = vmatprep.subr.bf16.mxu0 %v800
    %1040 = vmatpush1.bf16.msra.mxu0 %v799
    %1041 = vmatprep.subr.bf16.mxu0 %v804
    %1042 = vmatpush1.bf16.msra.mxu0 %v803
    %1043 = vmatprep.subr.bf16.mxu0 %v808
    %1044 = vmatpush1.bf16.msra.mxu0 %v807
    %1045 = vmatprep.subr.bf16.mxu0 %v812
    %1046 = vmatpush1.bf16.msra.mxu0 %v811
    %1047 = vmatprep.subr.bf16.mxu0 %v816
    %1048 = vmatpush1.bf16.msra.mxu0 %v815
    %1049 = vmatprep.subr.bf16.mxu0 %v820
    %1050 = vmatpush1.bf16.msra.mxu0 %v819
    %1051 = vmatprep.subr.bf16.mxu0 %v824
    %1052 = vmatpush1.bf16.msra.mxu0 %v823
    %1053 = vmatprep.subr.bf16.mxu0 %v828
    %1054 = vmatpush1.bf16.msra.mxu0 %v827
    %1055 = vmatprep.mubr.bf16.mxu0 %v252
    %1056 = vmatmul.mubr.bf16.gmra.mrb[0].mxu0 %v251
    %v1057 = vpop.f32.mrb[0].mxu0
    %v1058 = vadd.f32 0.0, %v1057
    %v1059 = vpop.f32.mrb[0].mxu0
    %v1060 = vadd.f32 0.0, %v1059
    %v1061 = vpop.f32.mrb[0].mxu0
    %v1062 = vpop.f32.mrb[0].mxu0
    %1063 = vdwg.mxu0
    %1064 = vmatprep.subr.bf16.mxu0 %v832
    %1065 = vmatpush1.bf16.msra.mxu0 %v831
    %1066 = vmatprep.subr.bf16.mxu0 %v836
    %1067 = vmatpush1.bf16.msra.mxu0 %v835
    %1068 = vmatprep.subr.bf16.mxu0 %v840
    %1069 = vmatpush1.bf16.msra.mxu0 %v839
    %1070 = vmatprep.subr.bf16.mxu0 %v844
    %1071 = vmatpush1.bf16.msra.mxu0 %v843
    %1072 = vmatprep.subr.bf16.mxu0 %v848
    %1073 = vmatpush1.bf16.msra.mxu0 %v847
    %1074 = vmatprep.subr.bf16.mxu0 %v852
    %1075 = vmatpush1.bf16.msra.mxu0 %v851
    %1076 = vmatprep.subr.bf16.mxu0 %v856
    %1077 = vmatpush1.bf16.msra.mxu0 %v855
    %1078 = vmatprep.subr.bf16.mxu0 %v860
    %1079 = vmatpush1.bf16.msra.mxu0 %v859
    %1080 = vmatprep.subr.bf16.mxu0 %v864
    %1081 = vmatpush1.bf16.msra.mxu0 %v863
    %1082 = vmatprep.subr.bf16.mxu0 %v868
    %1083 = vmatpush1.bf16.msra.mxu0 %v867
    %1084 = vmatprep.subr.bf16.mxu0 %v872
    %1085 = vmatpush1.bf16.msra.mxu0 %v871
    %1086 = vmatprep.subr.bf16.mxu0 %v876
    %1087 = vmatpush1.bf16.msra.mxu0 %v875
    %1088 = vmatprep.subr.bf16.mxu0 %v880
    %1089 = vmatpush1.bf16.msra.mxu0 %v879
    %1090 = vmatprep.subr.bf16.mxu0 %v884
    %1091 = vmatpush1.bf16.msra.mxu0 %v883
    %1092 = vmatprep.subr.bf16.mxu0 %v888
    %1093 = vmatpush1.bf16.msra.mxu0 %v887
    %1094 = vmatprep.subr.bf16.mxu0 %v892
    %1095 = vmatpush1.bf16.msra.mxu0 %v891
    %1096 = vmatprep.mubr.bf16.mxu0 %v254
    %1097 = vmatmul.mubr.bf16.gmra.mrb[0].mxu0 %v253
    %v1098 = vpop.f32.mrb[0].mxu0
    %v1099 = vadd.f32 %v1058, %v1098
    %v1100 = vpop.f32.mrb[0].mxu0
    %v1101 = vadd.f32 %v1060, %v1100
    %v1102 = vpop.f32.mrb[0].mxu0
    %v1103 = vpop.f32.mrb[0].mxu0
    %1104 = vdwg.mxu0
    %1105 = vmatprep.subr.bf16.mxu0 %v770
    %1106 = vmatpush1.bf16.msra.mxu0 %v769
    %1107 = vmatprep.subr.bf16.mxu0 %v774
    %1108 = vmatpush1.bf16.msra.mxu0 %v773
    %1109 = vmatprep.subr.bf16.mxu0 %v778
    %1110 = vmatpush1.bf16.msra.mxu0 %v777
    %1111 = vmatprep.subr.bf16.mxu0 %v782
    %1112 = vmatpush1.bf16.msra.mxu0 %v781
    %1113 = vmatprep.subr.bf16.mxu0 %v786
    %1114 = vmatpush1.bf16.msra.mxu0 %v785
    %1115 = vmatprep.subr.bf16.mxu0 %v790
    %1116 = vmatpush1.bf16.msra.mxu0 %v789
    %1117 = vmatprep.subr.bf16.mxu0 %v794
    %1118 = vmatpush1.bf16.msra.mxu0 %v793
    %1119 = vmatprep.subr.bf16.mxu0 %v798
    %1120 = vmatpush1.bf16.msra.mxu0 %v797
    %1121 = vmatprep.subr.bf16.mxu0 %v802
    %1122 = vmatpush1.bf16.msra.mxu0 %v801
    %1123 = vmatprep.subr.bf16.mxu0 %v806
    %1124 = vmatpush1.bf16.msra.mxu0 %v805
    %1125 = vmatprep.subr.bf16.mxu0 %v810
    %1126 = vmatpush1.bf16.msra.mxu0 %v809
    %1127 = vmatprep.subr.bf16.mxu0 %v814
    %1128 = vmatpush1.bf16.msra.mxu0 %v813
    %1129 = vmatprep.subr.bf16.mxu0 %v818
    %1130 = vmatpush1.bf16.msra.mxu0 %v817
    %1131 = vmatprep.subr.bf16.mxu0 %v822
    %1132 = vmatpush1.bf16.msra.mxu0 %v821
    %1133 = vmatprep.subr.bf16.mxu0 %v826
    %1134 = vmatpush1.bf16.msra.mxu0 %v825
    %1135 = vmatprep.subr.bf16.mxu0 %v830
    %1136 = vmatpush1.bf16.msra.mxu0 %v829
    %1137 = vmatprep.mubr.bf16.mxu0 %v252
    %1138 = vmatmul.mubr.bf16.gmra.mrb[0].mxu0 %v251
    %v1139 = vpop.f32.mrb[0].mxu0
    %v1140 = vadd.f32 0.0, %v1139
    %v1141 = vpop.f32.mrb[0].mxu0
    %v1142 = vadd.f32 0.0, %v1141
    %v1143 = vpop.f32.mrb[0].mxu0
    %v1144 = vpop.f32.mrb[0].mxu0
    %1145 = vdwg.mxu0
    %1146 = vmatprep.subr.bf16.mxu0 %v834
    %1147 = vmatpush1.bf16.msra.mxu0 %v833
    %1148 = vmatprep.subr.bf16.mxu0 %v838
    %1149 = vmatpush1.bf16.msra.mxu0 %v837
    %1150 = vmatprep.subr.bf16.mxu0 %v842
    %1151 = vmatpush1.bf16.msra.mxu0 %v841
    %1152 = vmatprep.subr.bf16.mxu0 %v846
    %1153 = vmatpush1.bf16.msra.mxu0 %v845
    %1154 = vmatprep.subr.bf16.mxu0 %v850
    %1155 = vmatpush1.bf16.msra.mxu0 %v849
    %1156 = vmatprep.subr.bf16.mxu0 %v854
    %1157 = vmatpush1.bf16.msra.mxu0 %v853
    %1158 = vmatprep.subr.bf16.mxu0 %v858
    %1159 = vmatpush1.bf16.msra.mxu0 %v857
    %1160 = vmatprep.subr.bf16.mxu0 %v862
    %1161 = vmatpush1.bf16.msra.mxu0 %v861
    %1162 = vmatprep.subr.bf16.mxu0 %v866
    %1163 = vmatpush1.bf16.msra.mxu0 %v865
    %1164 = vmatprep.subr.bf16.mxu0 %v870
    %1165 = vmatpush1.bf16.msra.mxu0 %v869
    %1166 = vmatprep.subr.bf16.mxu0 %v874
    %1167 = vmatpush1.bf16.msra.mxu0 %v873
    %1168 = vmatprep.subr.bf16.mxu0 %v878
    %1169 = vmatpush1.bf16.msra.mxu0 %v877
    %1170 = vmatprep.subr.bf16.mxu0 %v882
    %1171 = vmatpush1.bf16.msra.mxu0 %v881
    %1172 = vmatprep.subr.bf16.mxu0 %v886
    %1173 = vmatpush1.bf16.msra.mxu0 %v885
    %1174 = vmatprep.subr.bf16.mxu0 %v890
    %1175 = vmatpush1.bf16.msra.mxu0 %v889
    %1176 = vmatprep.subr.bf16.mxu0 %v894
    %1177 = vmatpush1.bf16.msra.mxu0 %v893
    %1178 = vmatprep.mubr.bf16.mxu0 %v254
    %1179 = vmatmul.mubr.bf16.gmra.mrb[0].mxu0 %v253
    %v1180 = vpop.f32.mrb[0].mxu0
    %v1181 = vadd.f32 %v1140, %v1180
    %v1182 = vpop.f32.mrb[0].mxu0
    %v1183 = vadd.f32 %v1142, %v1182
    %v1184 = vpop.f32.mrb[0].mxu0
    %v1185 = vpop.f32.mrb[0].mxu0
    %1186 = vdwg.mxu0
    %v1187 = vld [vmem:[%s4] sm:$0xf]
    %v1188 = vld [vmem:[%s5] sm:$0xf]
    %v1189 = vrot.slane %v1099, 4
    %v1190 = vadd.f32 %v1099, %v1189
    %v1191 = vrot.slane %v1190, 2
    %v1192 = vadd.f32 %v1190, %v1191
    %v1193 = vrot.slane %v1192, 1
    %v1194 = vadd.f32 %v1192, %v1193
    %v1195 = vrot.slane %v1101, 4
    %v1196 = vadd.f32 %v1101, %v1195
    %v1197 = vrot.slane %v1196, 2
    %v1198 = vadd.f32 %v1196, %v1197
    %v1199 = vrot.slane %v1198, 1
    %v1200 = vadd.f32 %v1198, %v1199
    %v1201 = vrot.slane %v1181, 4
    %v1202 = vadd.f32 %v1181, %v1201
    %v1203 = vrot.slane %v1202, 2
    %v1204 = vadd.f32 %v1202, %v1203
    %v1205 = vrot.slane %v1204, 1
    %v1206 = vadd.f32 %v1204, %v1205
    %v1207 = vrot.slane %v1183, 4
    %v1208 = vadd.f32 %v1183, %v1207
    %v1209 = vrot.slane %v1208, 2
    %v1210 = vadd.f32 %v1208, %v1209
    %v1211 = vrot.slane %v1210, 1
    %v1212 = vadd.f32 %v1210, %v1211
    %v1213 = vmul.f32 %v1099, %v1099
    %v1214 = vmul.f32 %v1101, %v1101
    %v1215 = vmul.f32 %v1181, %v1181
    %v1216 = vmul.f32 %v1183, %v1183
    %v1217 = vrot.slane %v1213, 4
    %v1218 = vadd.f32 %v1213, %v1217
    %v1219 = vrot.slane %v1218, 2
    %v1220 = vadd.f32 %v1218, %v1219
    %v1221 = vrot.slane %v1220, 1
    %v1222 = vadd.f32 %v1220, %v1221
    %v1223 = vrot.slane %v1214, 4
    %v1224 = vadd.f32 %v1214, %v1223
    %v1225 = vrot.slane %v1224, 2
    %v1226 = vadd.f32 %v1224, %v1225
    %v1227 = vrot.slane %v1226, 1
    %v1228 = vadd.f32 %v1226, %v1227
    %v1229 = vrot.slane %v1215, 4
    %v1230 = vadd.f32 %v1215, %v1229
    %v1231 = vrot.slane %v1230, 2
    %v1232 = vadd.f32 %v1230, %v1231
    %v1233 = vrot.slane %v1232, 1
    %v1234 = vadd.f32 %v1232, %v1233
    %v1235 = vrot.slane %v1216, 4
    %v1236 = vadd.f32 %v1216, %v1235
    %v1237 = vrot.slane %v1236, 2
    %v1238 = vadd.f32 %v1236, %v1237
    %v1239 = vrot.slane %v1238, 1
    %v1240 = vadd.f32 %v1238, %v1239
    %v1241 = vmul.f32 %v1194, 0.125
    %v1242 = vmul.f32 %v1200, 0.125
    %v1243 = vmul.f32 %v1206, 0.125
    %v1244 = vmul.f32 %v1212, 0.125
    %v1245 = vmul.f32 %v1222, 0.125
    %v1246 = vmul.f32 %v1228, 0.125
    %v1247 = vmul.f32 %v1234, 0.125
    %v1248 = vmul.f32 %v1240, 0.125
    %v1249 = vmul.f32 %v1241, %v1241
    %v1250 = vmul.f32 %v1242, %v1242
    %v1251 = vmul.f32 %v1243, %v1243
    %v1252 = vmul.f32 %v1244, %v1244
    %v1253 = vsub.f32 %v1245, %v1249
    %v1254 = vsub.f32 %v1246, %v1250
    %v1255 = vsub.f32 %v1247, %v1251
    %v1256 = vsub.f32 %v1248, %v1252
    %v1257 = vmax.f32 %v1253, 0.0
    %v1258 = vmax.f32 %v1254, 0.0
    %v1259 = vmax.f32 %v1255, 0.0
    %v1260 = vmax.f32 %v1256, 0.0
    %v1261 = vadd.f32 %v1257, 1e-05
    %v1262 = vadd.f32 %v1258, 1e-05
    %v1263 = vadd.f32 %v1259, 1e-05
    %v1264 = vadd.f32 %v1260, 1e-05
    %v1265 = vrsqrt.pop %v1261
    %v1266 = vrsqrt.pop %v1262
    %v1267 = vrsqrt.pop %v1263
    %v1268 = vrsqrt.pop %v1264
    %v1273 = vcombine.low %v1265, %v1266
    %v1274 = vcombine.low %v1267, %v1268
    %v1276 = vunpack.c.l.s4 1966171168
    %v1277 = vunpack.c.0.s8 %v1276
    %v1278 = vlaneseq
    %v1279 = vshrl.u32 %v1278, 7
    %v1280 = vsub.s32 %v1277, %v1279
    %v1281 = vrot.slane %v1273, %v1280
    %v1283 = vunpack.c.l.s4 1966171168
    %v1284 = vunpack.c.0.s8 %v1283
    %v1285 = vlaneseq
    %v1286 = vshrl.u32 %v1285, 7
    %v1287 = vsub.s32 %v1284, %v1286
    %v1288 = vrot.slane %v1274, %v1287
    %v1289 = vcombine.low %v1281, %v1288
    %v1291 = vunpack.c.l.s4 1966171168
    %v1292 = vunpack.c.0.s8 %v1291
    %v1293 = vlaneseq
    %v1294 = vshrl.u32 %v1293, 7
    %v1295 = vsub.s32 %v1292, %v1294
    %v1296 = vrot.slane %v1289, %v1295
    %v1298 = vmul.f32 %v1187, %v1296
    %v1300 = vlaneseq
    %v1301 = vshrl.u32 %v1300, 7
    %v1302 = vsub.s32 0, %v1301
    %v1303 = vrot.slane %v1298, %v1302
    %v1304 = vlaneseq
    %v1305 = vshrl.u32 %v1304, 7
    %v1306 = vsub.s32 1, %v1305
    %v1307 = vrot.slane %v1298, %v1306
    %v1308 = vlaneseq
    %v1309 = vshrl.u32 %v1308, 7
    %v1310 = vsub.s32 2, %v1309
    %v1311 = vrot.slane %v1298, %v1310
    %v1312 = vlaneseq
    %v1313 = vshrl.u32 %v1312, 7
    %v1314 = vsub.s32 3, %v1313
    %v1315 = vrot.slane %v1298, %v1314
    %v1320 = vmul.f32 %v1241, %v1303
    %v1321 = vmul.f32 %v1242, %v1307
    %v1322 = vmul.f32 %v1243, %v1311
    %v1323 = vmul.f32 %v1244, %v1315
    %v1328 = vcombine.low %v1320, %v1321
    %v1329 = vcombine.low %v1322, %v1323
    %v1331 = vunpack.c.l.s4 1966171168
    %v1332 = vunpack.c.0.s8 %v1331
    %v1333 = vlaneseq
    %v1334 = vshrl.u32 %v1333, 7
    %v1335 = vsub.s32 %v1332, %v1334
    %v1336 = vrot.slane %v1328, %v1335
    %v1338 = vunpack.c.l.s4 1966171168
    %v1339 = vunpack.c.0.s8 %v1338
    %v1340 = vlaneseq
    %v1341 = vshrl.u32 %v1340, 7
    %v1342 = vsub.s32 %v1339, %v1341
    %v1343 = vrot.slane %v1329, %v1342
    %v1344 = vcombine.low %v1336, %v1343
    %v1346 = vunpack.c.l.s4 1966171168
    %v1347 = vunpack.c.0.s8 %v1346
    %v1348 = vlaneseq
    %v1349 = vshrl.u32 %v1348, 7
    %v1350 = vsub.s32 %v1347, %v1349
    %v1351 = vrot.slane %v1344, %v1350
    %v1353 = vsub.f32 %v1188, %v1351
    %v1354 = vmul.f32 %v1099, %v1303
    %v1355 = vmul.f32 %v1101, %v1307
    %v1356 = vmul.f32 %v1181, %v1311
    %v1357 = vmul.f32 %v1183, %v1315
    %v1359 = vlaneseq
    %v1360 = vshrl.u32 %v1359, 7
    %v1361 = vsub.s32 0, %v1360
    %v1362 = vrot.slane %v1353, %v1361
    %v1363 = vlaneseq
    %v1364 = vshrl.u32 %v1363, 7
    %v1365 = vsub.s32 1, %v1364
    %v1366 = vrot.slane %v1353, %v1365
    %v1367 = vlaneseq
    %v1368 = vshrl.u32 %v1367, 7
    %v1369 = vsub.s32 2, %v1368
    %v1370 = vrot.slane %v1353, %v1369
    %v1371 = vlaneseq
    %v1372 = vshrl.u32 %v1371, 7
    %v1373 = vsub.s32 3, %v1372
    %v1374 = vrot.slane %v1353, %v1373
    %v1379 = vadd.f32 %v1354, %v1362
    %v1380 = vadd.f32 %v1355, %v1366
    %v1381 = vadd.f32 %v1356, %v1370
    %v1382 = vadd.f32 %v1357, %v1374
    %v1383 = vmax.f32 %v1379, 0.0
    %v1384 = vmax.f32 %v1380, 0.0
    %v1385 = vmax.f32 %v1381, 0.0
    %v1386 = vmax.f32 %v1382, 0.0
    %v1387 = vpack.c.bf16 %v1383, %v1383
    %v1388 = vpack.c.bf16 %v1384, %v1384
    %v1389 = vpack.c.bf16 %v1385, %v1385
    %v1390 = vpack.c.bf16 %v1386, %v1386
    %v1391 = vld [vmem:[#allocation6] sm:$0xff]
    %v1392 = vld [vmem:[#allocation6 + $0x8] sm:$0xff]
    %v1393 = vld [vmem:[#allocation6 + $0x10] sm:$0xff]
    %v1394 = vld [vmem:[#allocation6 + $0x18] sm:$0xff]
    %v1395 = vld [vmem:[#allocation6 + $0x20] sm:$0xff]
    %v1396 = vld [vmem:[#allocation6 + $0x28] sm:$0xff]
    %v1397 = vld [vmem:[#allocation6 + $0x30] sm:$0xff]
    %v1398 = vld [vmem:[#allocation6 + $0x38] sm:$0xff]
    %v1399 = vld [vmem:[#allocation6 + $0x40] sm:$0xff]
    %v1400 = vld [vmem:[#allocation6 + $0x48] sm:$0xff]
    %v1401 = vld [vmem:[#allocation6 + $0x50] sm:$0xff]
    %v1402 = vld [vmem:[#allocation6 + $0x58] sm:$0xff]
    %v1403 = vld [vmem:[#allocation6 + $0x60] sm:$0xff]
    %v1404 = vld [vmem:[#allocation6 + $0x68] sm:$0xff]
    %v1405 = vld [vmem:[#allocation6 + $0x70] sm:$0xff]
    %v1406 = vld [vmem:[#allocation6 + $0x78] sm:$0xff]
    %v1407 = vld [vmem:[#allocation6 + $0x80] sm:$0xff]
    %v1408 = vld [vmem:[#allocation6 + $0x88] sm:$0xff]
    %v1409 = vld [vmem:[#allocation6 + $0x90] sm:$0xff]
    %v1410 = vld [vmem:[#allocation6 + $0x98] sm:$0xff]
    %v1411 = vld [vmem:[#allocation6 + $0xa0] sm:$0xff]
    %v1412 = vld [vmem:[#allocation6 + $0xa8] sm:$0xff]
    %v1413 = vld [vmem:[#allocation6 + $0xb0] sm:$0xff]
    %v1414 = vld [vmem:[#allocation6 + $0xb8] sm:$0xff]
    %v1415 = vld [vmem:[#allocation6 + $0xc0] sm:$0xff]
    %v1416 = vld [vmem:[#allocation6 + $0xc8] sm:$0xff]
    %v1417 = vld [vmem:[#allocation6 + $0xd0] sm:$0xff]
    %v1418 = vld [vmem:[#allocation6 + $0xd8] sm:$0xff]
    %v1419 = vld [vmem:[#allocation6 + $0xe0] sm:$0xff]
    %v1420 = vld [vmem:[#allocation6 + $0xe8] sm:$0xff]
    %v1421 = vld [vmem:[#allocation6 + $0xf0] sm:$0xff]
    %v1422 = vld [vmem:[#allocation6 + $0xf8] sm:$0xff]
    %v1423 = vld [vmem:[#allocation6 + $0x100] sm:$0xff]
    %v1424 = vld [vmem:[#allocation6 + $0x108] sm:$0xff]
    %v1425 = vld [vmem:[#allocation6 + $0x110] sm:$0xff]
    %v1426 = vld [vmem:[#allocation6 + $0x118] sm:$0xff]
    %v1427 = vld [vmem:[#allocation6 + $0x120] sm:$0xff]
    %v1428 = vld [vmem:[#allocation6 + $0x128] sm:$0xff]
    %v1429 = vld [vmem:[#allocation6 + $0x130] sm:$0xff]
    %v1430 = vld [vmem:[#allocation6 + $0x138] sm:$0xff]
    %v1431 = vld [vmem:[#allocation6 + $0x140] sm:$0xff]
    %v1432 = vld [vmem:[#allocation6 + $0x148] sm:$0xff]
    %v1433 = vld [vmem:[#allocation6 + $0x150] sm:$0xff]
    %v1434 = vld [vmem:[#allocation6 + $0x158] sm:$0xff]
    %v1435 = vld [vmem:[#allocation6 + $0x160] sm:$0xff]
    %v1436 = vld [vmem:[#allocation6 + $0x168] sm:$0xff]
    %v1437 = vld [vmem:[#allocation6 + $0x170] sm:$0xff]
    %v1438 = vld [vmem:[#allocation6 + $0x178] sm:$0xff]
    %v1439 = vld [vmem:[#allocation6 + $0x180] sm:$0xff]
    %v1440 = vld [vmem:[#allocation6 + $0x188] sm:$0xff]
    %v1441 = vld [vmem:[#allocation6 + $0x190] sm:$0xff]
    %v1442 = vld [vmem:[#allocation6 + $0x198] sm:$0xff]
    %v1443 = vld [vmem:[#allocation6 + $0x1a0] sm:$0xff]
    %v1444 = vld [vmem:[#allocation6 + $0x1a8] sm:$0xff]
    %v1445 = vld [vmem:[#allocation6 + $0x1b0] sm:$0xff]
    %v1446 = vld [vmem:[#allocation6 + $0x1b8] sm:$0xff]
    %v1447 = vld [vmem:[#allocation6 + $0x1c0] sm:$0xff]
    %v1448 = vld [vmem:[#allocation6 + $0x1c8] sm:$0xff]
    %v1449 = vld [vmem:[#allocation6 + $0x1d0] sm:$0xff]
    %v1450 = vld [vmem:[#allocation6 + $0x1d8] sm:$0xff]
    %v1451 = vld [vmem:[#allocation6 + $0x1e0] sm:$0xff]
    %v1452 = vld [vmem:[#allocation6 + $0x1e8] sm:$0xff]
    %v1453 = vld [vmem:[#allocation6 + $0x1f0] sm:$0xff]
    %v1454 = vld [vmem:[#allocation6 + $0x1f8] sm:$0xff]
    %v1519 = vunpack.c.l.b16 %v1391
    %v1520 = vunpack.c.h.b16 %v1391
    %v1521 = vunpack.c.l.b16 %v1392
    %v1522 = vunpack.c.h.b16 %v1392
    %v1523 = vunpack.c.l.b16 %v1393
    %v1524 = vunpack.c.h.b16 %v1393
    %v1525 = vunpack.c.l.b16 %v1394
    %v1526 = vunpack.c.h.b16 %v1394
    %v1527 = vunpack.c.l.b16 %v1395
    %v1528 = vunpack.c.h.b16 %v1395
    %v1529 = vunpack.c.l.b16 %v1396
    %v1530 = vunpack.c.h.b16 %v1396
    %v1531 = vunpack.c.l.b16 %v1397
    %v1532 = vunpack.c.h.b16 %v1397
    %v1533 = vunpack.c.l.b16 %v1398
    %v1534 = vunpack.c.h.b16 %v1398
    %v1535 = vunpack.c.l.b16 %v1399
    %v1536 = vunpack.c.h.b16 %v1399
    %v1537 = vunpack.c.l.b16 %v1400
    %v1538 = vunpack.c.h.b16 %v1400
    %v1539 = vunpack.c.l.b16 %v1401
    %v1540 = vunpack.c.h.b16 %v1401
    %v1541 = vunpack.c.l.b16 %v1402
    %v1542 = vunpack.c.h.b16 %v1402
    %v1543 = vunpack.c.l.b16 %v1403
    %v1544 = vunpack.c.h.b16 %v1403
    %v1545 = vunpack.c.l.b16 %v1404
    %v1546 = vunpack.c.h.b16 %v1404
    %v1547 = vunpack.c.l.b16 %v1405
    %v1548 = vunpack.c.h.b16 %v1405
    %v1549 = vunpack.c.l.b16 %v1406
    %v1550 = vunpack.c.h.b16 %v1406
    %v1551 = vunpack.c.l.b16 %v1407
    %v1552 = vunpack.c.h.b16 %v1407
    %v1553 = vunpack.c.l.b16 %v1408
    %v1554 = vunpack.c.h.b16 %v1408
    %v1555 = vunpack.c.l.b16 %v1409
    %v1556 = vunpack.c.h.b16 %v1409
    %v1557 = vunpack.c.l.b16 %v1410
    %v1558 = vunpack.c.h.b16 %v1410
    %v1559 = vunpack.c.l.b16 %v1411
    %v1560 = vunpack.c.h.b16 %v1411
    %v1561 = vunpack.c.l.b16 %v1412
    %v1562 = vunpack.c.h.b16 %v1412
    %v1563 = vunpack.c.l.b16 %v1413
    %v1564 = vunpack.c.h.b16 %v1413
    %v1565 = vunpack.c.l.b16 %v1414
    %v1566 = vunpack.c.h.b16 %v1414
    %v1567 = vunpack.c.l.b16 %v1415
    %v1568 = vunpack.c.h.b16 %v1415
    %v1569 = vunpack.c.l.b16 %v1416
    %v1570 = vunpack.c.h.b16 %v1416
    %v1571 = vunpack.c.l.b16 %v1417
    %v1572 = vunpack.c.h.b16 %v1417
    %v1573 = vunpack.c.l.b16 %v1418
    %v1574 = vunpack.c.h.b16 %v1418
    %v1575 = vunpack.c.l.b16 %v1419
    %v1576 = vunpack.c.h.b16 %v1419
    %v1577 = vunpack.c.l.b16 %v1420
    %v1578 = vunpack.c.h.b16 %v1420
    %v1579 = vunpack.c.l.b16 %v1421
    %v1580 = vunpack.c.h.b16 %v1421
    %v1581 = vunpack.c.l.b16 %v1422
    %v1582 = vunpack.c.h.b16 %v1422
    %v1583 = vunpack.c.l.b16 %v1423
    %v1584 = vunpack.c.h.b16 %v1423
    %v1585 = vunpack.c.l.b16 %v1424
    %v1586 = vunpack.c.h.b16 %v1424
    %v1587 = vunpack.c.l.b16 %v1425
    %v1588 = vunpack.c.h.b16 %v1425
    %v1589 = vunpack.c.l.b16 %v1426
    %v1590 = vunpack.c.h.b16 %v1426
    %v1591 = vunpack.c.l.b16 %v1427
    %v1592 = vunpack.c.h.b16 %v1427
    %v1593 = vunpack.c.l.b16 %v1428
    %v1594 = vunpack.c.h.b16 %v1428
    %v1595 = vunpack.c.l.b16 %v1429
    %v1596 = vunpack.c.h.b16 %v1429
    %v1597 = vunpack.c.l.b16 %v1430
    %v1598 = vunpack.c.h.b16 %v1430
    %v1599 = vunpack.c.l.b16 %v1431
    %v1600 = vunpack.c.h.b16 %v1431
    %v1601 = vunpack.c.l.b16 %v1432
    %v1602 = vunpack.c.h.b16 %v1432
    %v1603 = vunpack.c.l.b16 %v1433
    %v1604 = vunpack.c.h.b16 %v1433
    %v1605 = vunpack.c.l.b16 %v1434
    %v1606 = vunpack.c.h.b16 %v1434
    %v1607 = vunpack.c.l.b16 %v1435
    %v1608 = vunpack.c.h.b16 %v1435
    %v1609 = vunpack.c.l.b16 %v1436
    %v1610 = vunpack.c.h.b16 %v1436
    %v1611 = vunpack.c.l.b16 %v1437
    %v1612 = vunpack.c.h.b16 %v1437
    %v1613 = vunpack.c.l.b16 %v1438
    %v1614 = vunpack.c.h.b16 %v1438
    %v1615 = vunpack.c.l.b16 %v1439
    %v1616 = vunpack.c.h.b16 %v1439
    %v1617 = vunpack.c.l.b16 %v1440
    %v1618 = vunpack.c.h.b16 %v1440
    %v1619 = vunpack.c.l.b16 %v1441
    %v1620 = vunpack.c.h.b16 %v1441
    %v1621 = vunpack.c.l.b16 %v1442
    %v1622 = vunpack.c.h.b16 %v1442
    %v1623 = vunpack.c.l.b16 %v1443
    %v1624 = vunpack.c.h.b16 %v1443
    %v1625 = vunpack.c.l.b16 %v1444
    %v1626 = vunpack.c.h.b16 %v1444
    %v1627 = vunpack.c.l.b16 %v1445
    %v1628 = vunpack.c.h.b16 %v1445
    %v1629 = vunpack.c.l.b16 %v1446
    %v1630 = vunpack.c.h.b16 %v1446
    %v1631 = vunpack.c.l.b16 %v1447
    %v1632 = vunpack.c.h.b16 %v1447
    %v1633 = vunpack.c.l.b16 %v1448
    %v1634 = vunpack.c.h.b16 %v1448
    %v1635 = vunpack.c.l.b16 %v1449
    %v1636 = vunpack.c.h.b16 %v1449
    %v1637 = vunpack.c.l.b16 %v1450
    %v1638 = vunpack.c.h.b16 %v1450
    %v1639 = vunpack.c.l.b16 %v1451
    %v1640 = vunpack.c.h.b16 %v1451
    %v1641 = vunpack.c.l.b16 %v1452
    %v1642 = vunpack.c.h.b16 %v1452
    %v1643 = vunpack.c.l.b16 %v1453
    %v1644 = vunpack.c.h.b16 %v1453
    %v1645 = vunpack.c.l.b16 %v1454
    %v1646 = vunpack.c.h.b16 %v1454
    %v1647 = vpack.c.b16 %v1521, %v1519
    %v1648 = vpack.c.b16 %v1522, %v1520
    %v1649 = vpack.c.b16 %v1525, %v1523
    %v1650 = vpack.c.b16 %v1526, %v1524
    %v1651 = vpack.c.b16 %v1529, %v1527
    %v1652 = vpack.c.b16 %v1530, %v1528
    %v1653 = vpack.c.b16 %v1533, %v1531
    %v1654 = vpack.c.b16 %v1534, %v1532
    %v1655 = vpack.c.b16 %v1537, %v1535
    %v1656 = vpack.c.b16 %v1538, %v1536
    %v1657 = vpack.c.b16 %v1541, %v1539
    %v1658 = vpack.c.b16 %v1542, %v1540
    %v1659 = vpack.c.b16 %v1545, %v1543
    %v1660 = vpack.c.b16 %v1546, %v1544
    %v1661 = vpack.c.b16 %v1549, %v1547
    %v1662 = vpack.c.b16 %v1550, %v1548
    %v1663 = vpack.c.b16 %v1553, %v1551
    %v1664 = vpack.c.b16 %v1554, %v1552
    %v1665 = vpack.c.b16 %v1557, %v1555
    %v1666 = vpack.c.b16 %v1558, %v1556
    %v1667 = vpack.c.b16 %v1561, %v1559
    %v1668 = vpack.c.b16 %v1562, %v1560
    %v1669 = vpack.c.b16 %v1565, %v1563
    %v1670 = vpack.c.b16 %v1566, %v1564
    %v1671 = vpack.c.b16 %v1569, %v1567
    %v1672 = vpack.c.b16 %v1570, %v1568
    %v1673 = vpack.c.b16 %v1573, %v1571
    %v1674 = vpack.c.b16 %v1574, %v1572
    %v1675 = vpack.c.b16 %v1577, %v1575
    %v1676 = vpack.c.b16 %v1578, %v1576
    %v1677 = vpack.c.b16 %v1581, %v1579
    %v1678 = vpack.c.b16 %v1582, %v1580
    %v1679 = vpack.c.b16 %v1585, %v1583
    %v1680 = vpack.c.b16 %v1586, %v1584
    %v1681 = vpack.c.b16 %v1589, %v1587
    %v1682 = vpack.c.b16 %v1590, %v1588
    %v1683 = vpack.c.b16 %v1593, %v1591
    %v1684 = vpack.c.b16 %v1594, %v1592
    %v1685 = vpack.c.b16 %v1597, %v1595
    %v1686 = vpack.c.b16 %v1598, %v1596
    %v1687 = vpack.c.b16 %v1601, %v1599
    %v1688 = vpack.c.b16 %v1602, %v1600
    %v1689 = vpack.c.b16 %v1605, %v1603
    %v1690 = vpack.c.b16 %v1606, %v1604
    %v1691 = vpack.c.b16 %v1609, %v1607
    %v1692 = vpack.c.b16 %v1610, %v1608
    %v1693 = vpack.c.b16 %v1613, %v1611
    %v1694 = vpack.c.b16 %v1614, %v1612
    %v1695 = vpack.c.b16 %v1617, %v1615
    %v1696 = vpack.c.b16 %v1618, %v1616
    %v1697 = vpack.c.b16 %v1621, %v1619
    %v1698 = vpack.c.b16 %v1622, %v1620
    %v1699 = vpack.c.b16 %v1625, %v1623
    %v1700 = vpack.c.b16 %v1626, %v1624
    %v1701 = vpack.c.b16 %v1629, %v1627
    %v1702 = vpack.c.b16 %v1630, %v1628
    %v1703 = vpack.c.b16 %v1633, %v1631
    %v1704 = vpack.c.b16 %v1634, %v1632
    %v1705 = vpack.c.b16 %v1637, %v1635
    %v1706 = vpack.c.b16 %v1638, %v1636
    %v1707 = vpack.c.b16 %v1641, %v1639
    %v1708 = vpack.c.b16 %v1642, %v1640
    %v1709 = vpack.c.b16 %v1645, %v1643
    %v1710 = vpack.c.b16 %v1646, %v1644
    %1775 = vmatprep.subr.bf16.mxu0 %v1648
    %1776 = vmatpush1.bf16.msra.mxu0 %v1647
    %1777 = vmatprep.subr.bf16.mxu0 %v1650
    %1778 = vmatpush1.bf16.msra.mxu0 %v1649
    %1779 = vmatprep.subr.bf16.mxu0 %v1652
    %1780 = vmatpush1.bf16.msra.mxu0 %v1651
    %1781 = vmatprep.subr.bf16.mxu0 %v1654
    %1782 = vmatpush1.bf16.msra.mxu0 %v1653
    %1783 = vmatprep.subr.bf16.mxu0 %v1656
    %1784 = vmatpush1.bf16.msra.mxu0 %v1655
    %1785 = vmatprep.subr.bf16.mxu0 %v1658
    %1786 = vmatpush1.bf16.msra.mxu0 %v1657
    %1787 = vmatprep.subr.bf16.mxu0 %v1660
    %1788 = vmatpush1.bf16.msra.mxu0 %v1659
    %1789 = vmatprep.subr.bf16.mxu0 %v1662
    %1790 = vmatpush1.bf16.msra.mxu0 %v1661
    %1791 = vmatprep.subr.bf16.mxu0 %v1664
    %1792 = vmatpush1.bf16.msra.mxu0 %v1663
    %1793 = vmatprep.subr.bf16.mxu0 %v1666
    %1794 = vmatpush1.bf16.msra.mxu0 %v1665
    %1795 = vmatprep.subr.bf16.mxu0 %v1668
    %1796 = vmatpush1.bf16.msra.mxu0 %v1667
    %1797 = vmatprep.subr.bf16.mxu0 %v1670
    %1798 = vmatpush1.bf16.msra.mxu0 %v1669
    %1799 = vmatprep.subr.bf16.mxu0 %v1672
    %1800 = vmatpush1.bf16.msra.mxu0 %v1671
    %1801 = vmatprep.subr.bf16.mxu0 %v1674
    %1802 = vmatpush1.bf16.msra.mxu0 %v1673
    %1803 = vmatprep.subr.bf16.mxu0 %v1676
    %1804 = vmatpush1.bf16.msra.mxu0 %v1675
    %1805 = vmatprep.subr.bf16.mxu0 %v1678
    %1806 = vmatpush1.bf16.msra.mxu0 %v1677
    %1807 = vmatprep.mubr.bf16.mxu0 %v1388
    %1808 = vmatmul.mubr.bf16.gmra.mrb[0].mxu0 %v1387
    %v1809 = vpop.f32.mrb[0].mxu0
    %v1810 = vadd.f32 0.0, %v1809
    %v1811 = vpop.f32.mrb[0].mxu0
    %v1812 = vadd.f32 0.0, %v1811
    %v1813 = vpop.f32.mrb[0].mxu0
    %v1814 = vpop.f32.mrb[0].mxu0
    %1815 = vdwg.mxu0
    %1816 = vmatprep.subr.bf16.mxu0 %v1680
    %1817 = vmatpush1.bf16.msra.mxu0 %v1679
    %1818 = vmatprep.subr.bf16.mxu0 %v1682
    %1819 = vmatpush1.bf16.msra.mxu0 %v1681
    %1820 = vmatprep.subr.bf16.mxu0 %v1684
    %1821 = vmatpush1.bf16.msra.mxu0 %v1683
    %1822 = vmatprep.subr.bf16.mxu0 %v1686
    %1823 = vmatpush1.bf16.msra.mxu0 %v1685
    %1824 = vmatprep.subr.bf16.mxu0 %v1688
    %1825 = vmatpush1.bf16.msra.mxu0 %v1687
    %1826 = vmatprep.subr.bf16.mxu0 %v1690
    %1827 = vmatpush1.bf16.msra.mxu0 %v1689
    %1828 = vmatprep.subr.bf16.mxu0 %v1692
    %1829 = vmatpush1.bf16.msra.mxu0 %v1691
    %1830 = vmatprep.subr.bf16.mxu0 %v1694
    %1831 = vmatpush1.bf16.msra.mxu0 %v1693
    %1832 = vmatprep.subr.bf16.mxu0 %v1696
    %1833 = vmatpush1.bf16.msra.mxu0 %v1695
    %1834 = vmatprep.subr.bf16.mxu0 %v1698
    %1835 = vmatpush1.bf16.msra.mxu0 %v1697
    %1836 = vmatprep.subr.bf16.mxu0 %v1700
    %1837 = vmatpush1.bf16.msra.mxu0 %v1699
    %1838 = vmatprep.subr.bf16.mxu0 %v1702
    %1839 = vmatpush1.bf16.msra.mxu0 %v1701
    %1840 = vmatprep.subr.bf16.mxu0 %v1704
    %1841 = vmatpush1.bf16.msra.mxu0 %v1703
    %1842 = vmatprep.subr.bf16.mxu0 %v1706
    %1843 = vmatpush1.bf16.msra.mxu0 %v1705
    %1844 = vmatprep.subr.bf16.mxu0 %v1708
    %1845 = vmatpush1.bf16.msra.mxu0 %v1707
    %1846 = vmatprep.subr.bf16.mxu0 %v1710
    %1847 = vmatpush1.bf16.msra.mxu0 %v1709
    %1848 = vmatprep.mubr.bf16.mxu0 %v1390
    %1849 = vmatmul.mubr.bf16.gmra.mrb[0].mxu0 %v1389
    %v1850 = vpop.f32.mrb[0].mxu0
    %v1851 = vadd.f32 %v1810, %v1850
    %v1852 = vpop.f32.mrb[0].mxu0
    %v1853 = vadd.f32 %v1812, %v1852
    %v1854 = vpop.f32.mrb[0].mxu0
    %v1855 = vpop.f32.mrb[0].mxu0
    %1856 = vdwg.mxu0
    %v1857 = vld [vmem:[%s7] sm:$0x3]
    %v1858 = vld [vmem:[%s8] sm:$0x3]
    %v1859 = vrot.slane %v1851, 4
    %v1860 = vadd.f32 %v1851, %v1859
    %v1861 = vrot.slane %v1860, 2
    %v1862 = vadd.f32 %v1860, %v1861
    %v1863 = vrot.slane %v1862, 1
    %v1864 = vadd.f32 %v1862, %v1863
    %v1865 = vrot.slane %v1853, 4
    %v1866 = vadd.f32 %v1853, %v1865
    %v1867 = vrot.slane %v1866, 2
    %v1868 = vadd.f32 %v1866, %v1867
    %v1869 = vrot.slane %v1868, 1
    %v1870 = vadd.f32 %v1868, %v1869
    %v1871 = vmul.f32 %v1851, %v1851
    %v1872 = vmul.f32 %v1853, %v1853
    %v1873 = vrot.slane %v1871, 4
    %v1874 = vadd.f32 %v1871, %v1873
    %v1875 = vrot.slane %v1874, 2
    %v1876 = vadd.f32 %v1874, %v1875
    %v1877 = vrot.slane %v1876, 1
    %v1878 = vadd.f32 %v1876, %v1877
    %v1879 = vrot.slane %v1872, 4
    %v1880 = vadd.f32 %v1872, %v1879
    %v1881 = vrot.slane %v1880, 2
    %v1882 = vadd.f32 %v1880, %v1881
    %v1883 = vrot.slane %v1882, 1
    %v1884 = vadd.f32 %v1882, %v1883
    %v1885 = vmul.f32 %v1864, 0.125
    %v1886 = vmul.f32 %v1870, 0.125
    %v1887 = vmul.f32 %v1878, 0.125
    %v1888 = vmul.f32 %v1884, 0.125
    %v1889 = vmul.f32 %v1885, %v1885
    %v1890 = vmul.f32 %v1886, %v1886
    %v1891 = vsub.f32 %v1887, %v1889
    %v1892 = vsub.f32 %v1888, %v1890
    %v1893 = vmax.f32 %v1891, 0.0
    %v1894 = vmax.f32 %v1892, 0.0
    %v1895 = vadd.f32 %v1893, 1e-05
    %v1896 = vadd.f32 %v1894, 1e-05
    %v1897 = vrsqrt.pop %v1895
    %v1898 = vrsqrt.pop %v1896
    %v1901 = vcombine.low %v1897, %v1898
    %v1903 = vunpack.c.l.s4 1966171168
    %v1904 = vunpack.c.0.s8 %v1903
    %v1905 = vlaneseq
    %v1906 = vshrl.u32 %v1905, 7
    %v1907 = vsub.s32 %v1904, %v1906
    %v1908 = vrot.slane %v1901, %v1907
    %v1910 = vunpack.c.l.s4 1966171168
    %v1911 = vunpack.c.0.s8 %v1910
    %v1912 = vlaneseq
    %v1913 = vshrl.u32 %v1912, 7
    %v1914 = vsub.s32 %v1911, %v1913
    %v1915 = vrot.slane %v1908, %v1914
    %v1917 = vmul.f32 %v1857, %v1915
    %v1919 = vlaneseq
    %v1920 = vshrl.u32 %v1919, 7
    %v1921 = vsub.s32 0, %v1920
    %v1922 = vrot.slane %v1917, %v1921
    %v1923 = vlaneseq
    %v1924 = vshrl.u32 %v1923, 7
    %v1925 = vsub.s32 1, %v1924
    %v1926 = vrot.slane %v1917, %v1925
    %v1929 = vmul.f32 %v1885, %v1922
    %v1930 = vmul.f32 %v1886, %v1926
    %v1933 = vcombine.low %v1929, %v1930
    %v1935 = vunpack.c.l.s4 1966171168
    %v1936 = vunpack.c.0.s8 %v1935
    %v1937 = vlaneseq
    %v1938 = vshrl.u32 %v1937, 7
    %v1939 = vsub.s32 %v1936, %v1938
    %v1940 = vrot.slane %v1933, %v1939
    %v1942 = vunpack.c.l.s4 1966171168
    %v1943 = vunpack.c.0.s8 %v1942
    %v1944 = vlaneseq
    %v1945 = vshrl.u32 %v1944, 7
    %v1946 = vsub.s32 %v1943, %v1945
    %v1947 = vrot.slane %v1940, %v1946
    %v1949 = vsub.f32 %v1858, %v1947
    %v1950 = vmul.f32 %v1851, %v1922
    %v1951 = vmul.f32 %v1853, %v1926
    %v1953 = vlaneseq
    %v1954 = vshrl.u32 %v1953, 7
    %v1955 = vsub.s32 0, %v1954
    %v1956 = vrot.slane %v1949, %v1955
    %v1957 = vlaneseq
    %v1958 = vshrl.u32 %v1957, 7
    %v1959 = vsub.s32 1, %v1958
    %v1960 = vrot.slane %v1949, %v1959
    %v1963 = vadd.f32 %v1950, %v1956
    %v1964 = vadd.f32 %v1951, %v1960
    %v1965 = vmax.f32 %v1963, 0.0
    %v1966 = vmax.f32 %v1964, 0.0
    %v1967 = vpack.c.bf16 %v1965, %v1965
    %v1968 = vpack.c.bf16 %v1966, %v1966
    %v1969 = vld [vmem:[%s9] sm:$0xff]
    %v1970 = vld [vmem:[%s9 + $0x8] sm:$0xff]
    %v1971 = vld [vmem:[%s9 + $0x10] sm:$0xff]
    %v1972 = vld [vmem:[%s9 + $0x18] sm:$0xff]
    %v1973 = vld [vmem:[%s9 + $0x20] sm:$0xff]
    %v1974 = vld [vmem:[%s9 + $0x28] sm:$0xff]
    %v1975 = vld [vmem:[%s9 + $0x30] sm:$0xff]
    %v1976 = vld [vmem:[%s9 + $0x38] sm:$0xff]
    %v1977 = vld [vmem:[%s9 + $0x40] sm:$0xff]
    %v1978 = vld [vmem:[%s9 + $0x48] sm:$0xff]
    %v1979 = vld [vmem:[%s9 + $0x50] sm:$0xff]
    %v1980 = vld [vmem:[%s9 + $0x58] sm:$0xff]
    %v1981 = vld [vmem:[%s9 + $0x60] sm:$0xff]
    %v1982 = vld [vmem:[%s9 + $0x68] sm:$0xff]
    %v1983 = vld [vmem:[%s9 + $0x70] sm:$0xff]
    %v1984 = vld [vmem:[%s9 + $0x78] sm:$0xff]
    %v1985 = vld [vmem:[%s9 + $0x80] sm:$0xff]
    %v1986 = vld [vmem:[%s9 + $0x88] sm:$0xff]
    %v1987 = vld [vmem:[%s9 + $0x90] sm:$0xff]
    %v1988 = vld [vmem:[%s9 + $0x98] sm:$0xff]
    %v1989 = vld [vmem:[%s9 + $0xa0] sm:$0xff]
    %v1990 = vld [vmem:[%s9 + $0xa8] sm:$0xff]
    %v1991 = vld [vmem:[%s9 + $0xb0] sm:$0xff]
    %v1992 = vld [vmem:[%s9 + $0xb8] sm:$0xff]
    %v1993 = vld [vmem:[%s9 + $0xc0] sm:$0xff]
    %v1994 = vld [vmem:[%s9 + $0xc8] sm:$0xff]
    %v1995 = vld [vmem:[%s9 + $0xd0] sm:$0xff]
    %v1996 = vld [vmem:[%s9 + $0xd8] sm:$0xff]
    %v1997 = vld [vmem:[%s9 + $0xe0] sm:$0xff]
    %v1998 = vld [vmem:[%s9 + $0xe8] sm:$0xff]
    %v1999 = vld [vmem:[%s9 + $0xf0] sm:$0xff]
    %v2000 = vld [vmem:[%s9 + $0xf8] sm:$0xff]
    %v2033 = vunpack.c.l.b16 %v1969
    %v2034 = vunpack.c.h.b16 %v1969
    %v2035 = vunpack.c.l.b16 %v1970
    %v2036 = vunpack.c.h.b16 %v1970
    %v2037 = vunpack.c.l.b16 %v1971
    %v2038 = vunpack.c.h.b16 %v1971
    %v2039 = vunpack.c.l.b16 %v1972
    %v2040 = vunpack.c.h.b16 %v1972
    %v2041 = vunpack.c.l.b16 %v1973
    %v2042 = vunpack.c.h.b16 %v1973
    %v2043 = vunpack.c.l.b16 %v1974
    %v2044 = vunpack.c.h.b16 %v1974
    %v2045 = vunpack.c.l.b16 %v1975
    %v2046 = vunpack.c.h.b16 %v1975
    %v2047 = vunpack.c.l.b16 %v1976
    %v2048 = vunpack.c.h.b16 %v1976
    %v2049 = vunpack.c.l.b16 %v1977
    %v2050 = vunpack.c.h.b16 %v1977
    %v2051 = vunpack.c.l.b16 %v1978
    %v2052 = vunpack.c.h.b16 %v1978
    %v2053 = vunpack.c.l.b16 %v1979
    %v2054 = vunpack.c.h.b16 %v1979
    %v2055 = vunpack.c.l.b16 %v1980
    %v2056 = vunpack.c.h.b16 %v1980
    %v2057 = vunpack.c.l.b16 %v1981
    %v2058 = vunpack.c.h.b16 %v1981
    %v2059 = vunpack.c.l.b16 %v1982
    %v2060 = vunpack.c.h.b16 %v1982
    %v2061 = vunpack.c.l.b16 %v1983
    %v2062 = vunpack.c.h.b16 %v1983
    %v2063 = vunpack.c.l.b16 %v1984
    %v2064 = vunpack.c.h.b16 %v1984
    %v2065 = vunpack.c.l.b16 %v1985
    %v2066 = vunpack.c.h.b16 %v1985
    %v2067 = vunpack.c.l.b16 %v1986
    %v2068 = vunpack.c.h.b16 %v1986
    %v2069 = vunpack.c.l.b16 %v1987
    %v2070 = vunpack.c.h.b16 %v1987
    %v2071 = vunpack.c.l.b16 %v1988
    %v2072 = vunpack.c.h.b16 %v1988
    %v2073 = vunpack.c.l.b16 %v1989
    %v2074 = vunpack.c.h.b16 %v1989
    %v2075 = vunpack.c.l.b16 %v1990
    %v2076 = vunpack.c.h.b16 %v1990
    %v2077 = vunpack.c.l.b16 %v1991
    %v2078 = vunpack.c.h.b16 %v1991
    %v2079 = vunpack.c.l.b16 %v1992
    %v2080 = vunpack.c.h.b16 %v1992
    %v2081 = vunpack.c.l.b16 %v1993
    %v2082 = vunpack.c.h.b16 %v1993
    %v2083 = vunpack.c.l.b16 %v1994
    %v2084 = vunpack.c.h.b16 %v1994
    %v2085 = vunpack.c.l.b16 %v1995
    %v2086 = vunpack.c.h.b16 %v1995
    %v2087 = vunpack.c.l.b16 %v1996
    %v2088 = vunpack.c.h.b16 %v1996
    %v2089 = vunpack.c.l.b16 %v1997
    %v2090 = vunpack.c.h.b16 %v1997
    %v2091 = vunpack.c.l.b16 %v1998
    %v2092 = vunpack.c.h.b16 %v1998
    %v2093 = vunpack.c.l.b16 %v1999
    %v2094 = vunpack.c.h.b16 %v1999
    %v2095 = vunpack.c.l.b16 %v2000
    %v2096 = vunpack.c.h.b16 %v2000
    %v2097 = vpack.c.b16 %v2035, %v2033
    %v2098 = vpack.c.b16 %v2036, %v2034
    %v2099 = vpack.c.b16 %v2039, %v2037
    %v2100 = vpack.c.b16 %v2040, %v2038
    %v2101 = vpack.c.b16 %v2043, %v2041
    %v2102 = vpack.c.b16 %v2044, %v2042
    %v2103 = vpack.c.b16 %v2047, %v2045
    %v2104 = vpack.c.b16 %v2048, %v2046
    %v2105 = vpack.c.b16 %v2051, %v2049
    %v2106 = vpack.c.b16 %v2052, %v2050
    %v2107 = vpack.c.b16 %v2055, %v2053
    %v2108 = vpack.c.b16 %v2056, %v2054
    %v2109 = vpack.c.b16 %v2059, %v2057
    %v2110 = vpack.c.b16 %v2060, %v2058
    %v2111 = vpack.c.b16 %v2063, %v2061
    %v2112 = vpack.c.b16 %v2064, %v2062
    %v2113 = vpack.c.b16 %v2067, %v2065
    %v2114 = vpack.c.b16 %v2068, %v2066
    %v2115 = vpack.c.b16 %v2071, %v2069
    %v2116 = vpack.c.b16 %v2072, %v2070
    %v2117 = vpack.c.b16 %v2075, %v2073
    %v2118 = vpack.c.b16 %v2076, %v2074
    %v2119 = vpack.c.b16 %v2079, %v2077
    %v2120 = vpack.c.b16 %v2080, %v2078
    %v2121 = vpack.c.b16 %v2083, %v2081
    %v2122 = vpack.c.b16 %v2084, %v2082
    %v2123 = vpack.c.b16 %v2087, %v2085
    %v2124 = vpack.c.b16 %v2088, %v2086
    %v2125 = vpack.c.b16 %v2091, %v2089
    %v2126 = vpack.c.b16 %v2092, %v2090
    %v2127 = vpack.c.b16 %v2095, %v2093
    %v2128 = vpack.c.b16 %v2096, %v2094
    %2161 = vmatprep.subr.bf16.mxu0 %v2098
    %2162 = vmatpush1.bf16.msra.mxu0 %v2097
    %2163 = vmatprep.subr.bf16.mxu0 %v2100
    %2164 = vmatpush1.bf16.msra.mxu0 %v2099
    %2165 = vmatprep.subr.bf16.mxu0 %v2102
    %2166 = vmatpush1.bf16.msra.mxu0 %v2101
    %2167 = vmatprep.subr.bf16.mxu0 %v2104
    %2168 = vmatpush1.bf16.msra.mxu0 %v2103
    %2169 = vmatprep.subr.bf16.mxu0 %v2106
    %2170 = vmatpush1.bf16.msra.mxu0 %v2105
    %2171 = vmatprep.subr.bf16.mxu0 %v2108
    %2172 = vmatpush1.bf16.msra.mxu0 %v2107
    %2173 = vmatprep.subr.bf16.mxu0 %v2110
    %2174 = vmatpush1.bf16.msra.mxu0 %v2109
    %2175 = vmatprep.subr.bf16.mxu0 %v2112
    %2176 = vmatpush1.bf16.msra.mxu0 %v2111
    %2177 = vmatprep.subr.bf16.mxu0 %v2114
    %2178 = vmatpush1.bf16.msra.mxu0 %v2113
    %2179 = vmatprep.subr.bf16.mxu0 %v2116
    %2180 = vmatpush1.bf16.msra.mxu0 %v2115
    %2181 = vmatprep.subr.bf16.mxu0 %v2118
    %2182 = vmatpush1.bf16.msra.mxu0 %v2117
    %2183 = vmatprep.subr.bf16.mxu0 %v2120
    %2184 = vmatpush1.bf16.msra.mxu0 %v2119
    %2185 = vmatprep.subr.bf16.mxu0 %v2122
    %2186 = vmatpush1.bf16.msra.mxu0 %v2121
    %2187 = vmatprep.subr.bf16.mxu0 %v2124
    %2188 = vmatpush1.bf16.msra.mxu0 %v2123
    %2189 = vmatprep.subr.bf16.mxu0 %v2126
    %2190 = vmatpush1.bf16.msra.mxu0 %v2125
    %2191 = vmatprep.subr.bf16.mxu0 %v2128
    %2192 = vmatpush1.bf16.msra.mxu0 %v2127
    %2193 = vmatprep.mubr.bf16.mxu0 %v1968
    %2194 = vmatmul.mubr.bf16.gmra.mrb[0].mxu0 %v1967
    %v2195 = vpop.f32.mrb[0].mxu0
    %v2196 = vadd.f32 0.0, %v2195
    %v2197 = vpop.f32.mrb[0].mxu0
    %v2198 = vadd.f32 0.0, %v2197
    %v2199 = vpop.f32.mrb[0].mxu0
    %v2200 = vpop.f32.mrb[0].mxu0
    %2201 = vdwg.mxu0
    %v2202 = vld [vmem:[%s10] sm:$0x3]
    %v2203 = vld [vmem:[%s11] sm:$0x3]
    %v2204 = vrot.slane %v2196, 4
    %v2205 = vadd.f32 %v2196, %v2204
    %v2206 = vrot.slane %v2205, 2
    %v2207 = vadd.f32 %v2205, %v2206
    %v2208 = vrot.slane %v2207, 1
    %v2209 = vadd.f32 %v2207, %v2208
    %v2210 = vrot.slane %v2198, 4
    %v2211 = vadd.f32 %v2198, %v2210
    %v2212 = vrot.slane %v2211, 2
    %v2213 = vadd.f32 %v2211, %v2212
    %v2214 = vrot.slane %v2213, 1
    %v2215 = vadd.f32 %v2213, %v2214
    %v2216 = vmul.f32 %v2196, %v2196
    %v2217 = vmul.f32 %v2198, %v2198
    %v2218 = vrot.slane %v2216, 4
    %v2219 = vadd.f32 %v2216, %v2218
    %v2220 = vrot.slane %v2219, 2
    %v2221 = vadd.f32 %v2219, %v2220
    %v2222 = vrot.slane %v2221, 1
    %v2223 = vadd.f32 %v2221, %v2222
    %v2224 = vrot.slane %v2217, 4
    %v2225 = vadd.f32 %v2217, %v2224
    %v2226 = vrot.slane %v2225, 2
    %v2227 = vadd.f32 %v2225, %v2226
    %v2228 = vrot.slane %v2227, 1
    %v2229 = vadd.f32 %v2227, %v2228
    %v2230 = vmul.f32 %v2209, 0.125
    %v2231 = vmul.f32 %v2215, 0.125
    %v2232 = vmul.f32 %v2223, 0.125
    %v2233 = vmul.f32 %v2229, 0.125
    %v2234 = vmul.f32 %v2230, %v2230
    %v2235 = vmul.f32 %v2231, %v2231
    %v2236 = vsub.f32 %v2232, %v2234
    %v2237 = vsub.f32 %v2233, %v2235
    %v2238 = vmax.f32 %v2236, 0.0
    %v2239 = vmax.f32 %v2237, 0.0
    %v2240 = vadd.f32 %v2238, 1e-05
    %v2241 = vadd.f32 %v2239, 1e-05
    %v2242 = vrsqrt.pop %v2240
    %v2243 = vrsqrt.pop %v2241
    %v2246 = vcombine.low %v2242, %v2243
    %v2248 = vunpack.c.l.s4 1966171168
    %v2249 = vunpack.c.0.s8 %v2248
    %v2250 = vlaneseq
    %v2251 = vshrl.u32 %v2250, 7
    %v2252 = vsub.s32 %v2249, %v2251
    %v2253 = vrot.slane %v2246, %v2252
    %v2255 = vunpack.c.l.s4 1966171168
    %v2256 = vunpack.c.0.s8 %v2255
    %v2257 = vlaneseq
    %v2258 = vshrl.u32 %v2257, 7
    %v2259 = vsub.s32 %v2256, %v2258
    %v2260 = vrot.slane %v2253, %v2259
    %v2262 = vmul.f32 %v2202, %v2260
    %v2264 = vlaneseq
    %v2265 = vshrl.u32 %v2264, 7
    %v2266 = vsub.s32 0, %v2265
    %v2267 = vrot.slane %v2262, %v2266
    %v2268 = vlaneseq
    %v2269 = vshrl.u32 %v2268, 7
    %v2270 = vsub.s32 1, %v2269
    %v2271 = vrot.slane %v2262, %v2270
    %v2274 = vmul.f32 %v2230, %v2267
    %v2275 = vmul.f32 %v2231, %v2271
    %v2278 = vcombine.low %v2274, %v2275
    %v2280 = vunpack.c.l.s4 1966171168
    %v2281 = vunpack.c.0.s8 %v2280
    %v2282 = vlaneseq
    %v2283 = vshrl.u32 %v2282, 7
    %v2284 = vsub.s32 %v2281, %v2283
    %v2285 = vrot.slane %v2278, %v2284
    %v2287 = vunpack.c.l.s4 1966171168
    %v2288 = vunpack.c.0.s8 %v2287
    %v2289 = vlaneseq
    %v2290 = vshrl.u32 %v2289, 7
    %v2291 = vsub.s32 %v2288, %v2290
    %v2292 = vrot.slane %v2285, %v2291
    %v2294 = vsub.f32 %v2203, %v2292
    %v2295 = vmul.f32 %v2196, %v2267
    %v2296 = vmul.f32 %v2198, %v2271
    %v2298 = vlaneseq
    %v2299 = vshrl.u32 %v2298, 7
    %v2300 = vsub.s32 0, %v2299
    %v2301 = vrot.slane %v2294, %v2300
    %v2302 = vlaneseq
    %v2303 = vshrl.u32 %v2302, 7
    %v2304 = vsub.s32 1, %v2303
    %v2305 = vrot.slane %v2294, %v2304
    %v2308 = vadd.f32 %v2295, %v2301
    %v2309 = vadd.f32 %v2296, %v2305
    %v2310 = vmax.f32 %v2308, 0.0
    %v2311 = vmax.f32 %v2309, 0.0
    %v2312 = vpack.c.bf16 %v2310, %v2310
    %v2313 = vpack.c.bf16 %v2311, %v2311
    %v2314 = vld [vmem:[%s12] sm:$0xf]
    %v2315 = vld [vmem:[%s12 + $0x4] sm:$0xf]
    %v2316 = vld [vmem:[%s12 + $0x8] sm:$0xf]
    %v2317 = vld [vmem:[%s12 + $0xc] sm:$0xf]
    %v2318 = vld [vmem:[%s12 + $0x10] sm:$0xf]
    %v2319 = vld [vmem:[%s12 + $0x14] sm:$0xf]
    %v2320 = vld [vmem:[%s12 + $0x18] sm:$0xf]
    %v2321 = vld [vmem:[%s12 + $0x1c] sm:$0xf]
    %v2322 = vld [vmem:[%s12 + $0x20] sm:$0xf]
    %v2323 = vld [vmem:[%s12 + $0x24] sm:$0xf]
    %v2324 = vld [vmem:[%s12 + $0x28] sm:$0xf]
    %v2325 = vld [vmem:[%s12 + $0x2c] sm:$0xf]
    %v2326 = vld [vmem:[%s12 + $0x30] sm:$0xf]
    %v2327 = vld [vmem:[%s12 + $0x34] sm:$0xf]
    %v2328 = vld [vmem:[%s12 + $0x38] sm:$0xf]
    %v2329 = vld [vmem:[%s12 + $0x3c] sm:$0xf]
    %v2330 = vld [vmem:[%s12 + $0x40] sm:$0xf]
    %v2331 = vld [vmem:[%s12 + $0x44] sm:$0xf]
    %v2332 = vld [vmem:[%s12 + $0x48] sm:$0xf]
    %v2333 = vld [vmem:[%s12 + $0x4c] sm:$0xf]
    %v2334 = vld [vmem:[%s12 + $0x50] sm:$0xf]
    %v2335 = vld [vmem:[%s12 + $0x54] sm:$0xf]
    %v2336 = vld [vmem:[%s12 + $0x58] sm:$0xf]
    %v2337 = vld [vmem:[%s12 + $0x5c] sm:$0xf]
    %v2338 = vld [vmem:[%s12 + $0x60] sm:$0xf]
    %v2339 = vld [vmem:[%s12 + $0x64] sm:$0xf]
    %v2340 = vld [vmem:[%s12 + $0x68] sm:$0xf]
    %v2341 = vld [vmem:[%s12 + $0x6c] sm:$0xf]
    %v2342 = vld [vmem:[%s12 + $0x70] sm:$0xf]
    %v2343 = vld [vmem:[%s12 + $0x74] sm:$0xf]
    %v2344 = vld [vmem:[%s12 + $0x78] sm:$0xf]
    %v2345 = vld [vmem:[%s12 + $0x7c] sm:$0xf]
    %v2346 = vld [vmem:[%s12 + $0x80] sm:$0xf]
    %v2347 = vld [vmem:[%s12 + $0x84] sm:$0xf]
    %v2348 = vld [vmem:[%s12 + $0x88] sm:$0xf]
    %v2349 = vld [vmem:[%s12 + $0x8c] sm:$0xf]
    %v2350 = vld [vmem:[%s12 + $0x90] sm:$0xf]
    %v2351 = vld [vmem:[%s12 + $0x94] sm:$0xf]
    %v2352 = vld [vmem:[%s12 + $0x98] sm:$0xf]
    %v2353 = vld [vmem:[%s12 + $0x9c] sm:$0xf]
    %v2354 = vld [vmem:[%s12 + $0xa0] sm:$0xf]
    %v2355 = vld [vmem:[%s12 + $0xa4] sm:$0xf]
    %v2356 = vld [vmem:[%s12 + $0xa8] sm:$0xf]
    %v2357 = vld [vmem:[%s12 + $0xac] sm:$0xf]
    %v2358 = vld [vmem:[%s12 + $0xb0] sm:$0xf]
    %v2359 = vld [vmem:[%s12 + $0xb4] sm:$0xf]
    %v2360 = vld [vmem:[%s12 + $0xb8] sm:$0xf]
    %v2361 = vld [vmem:[%s12 + $0xbc] sm:$0xf]
    %v2362 = vld [vmem:[%s12 + $0xc0] sm:$0xf]
    %v2363 = vld [vmem:[%s12 + $0xc4] sm:$0xf]
    %v2364 = vld [vmem:[%s12 + $0xc8] sm:$0xf]
    %v2365 = vld [vmem:[%s12 + $0xcc] sm:$0xf]
    %v2366 = vld [vmem:[%s12 + $0xd0] sm:$0xf]
    %v2367 = vld [vmem:[%s12 + $0xd4] sm:$0xf]
    %v2368 = vld [vmem:[%s12 + $0xd8] sm:$0xf]
    %v2369 = vld [vmem:[%s12 + $0xdc] sm:$0xf]
    %v2370 = vld [vmem:[%s12 + $0xe0] sm:$0xf]
    %v2371 = vld [vmem:[%s12 + $0xe4] sm:$0xf]
    %v2372 = vld [vmem:[%s12 + $0xe8] sm:$0xf]
    %v2373 = vld [vmem:[%s12 + $0xec] sm:$0xf]
    %v2374 = vld [vmem:[%s12 + $0xf0] sm:$0xf]
    %v2375 = vld [vmem:[%s12 + $0xf4] sm:$0xf]
    %v2376 = vld [vmem:[%s12 + $0xf8] sm:$0xf]
    %v2377 = vld [vmem:[%s12 + $0xfc] sm:$0xf]
    %v2378 = vld [vmem:[%s13] sm:$0x1]
    %v2380 = vlaneseq
    %v2381 = vshrl.u32 %v2380, 7
    %v2382 = vsub.s32 0, %v2381
    %v2383 = vrot.slane %v2378, %v2382
    %v2449 = vunpack.c.l.b16 %v2314
    %v2450 = vunpack.c.l.b16 %v2315
    %v2451 = vunpack.c.l.b16 %v2316
    %v2452 = vunpack.c.l.b16 %v2317
    %v2453 = vunpack.c.l.b16 %v2318
    %v2454 = vunpack.c.l.b16 %v2319
    %v2455 = vunpack.c.l.b16 %v2320
    %v2456 = vunpack.c.l.b16 %v2321
    %v2457 = vunpack.c.l.b16 %v2322
    %v2458 = vunpack.c.l.b16 %v2323
    %v2459 = vunpack.c.l.b16 %v2324
    %v2460 = vunpack.c.l.b16 %v2325
    %v2461 = vunpack.c.l.b16 %v2326
    %v2462 = vunpack.c.l.b16 %v2327
    %v2463 = vunpack.c.l.b16 %v2328
    %v2464 = vunpack.c.l.b16 %v2329
    %v2465 = vunpack.c.l.b16 %v2330
    %v2466 = vunpack.c.l.b16 %v2331
    %v2467 = vunpack.c.l.b16 %v2332
    %v2468 = vunpack.c.l.b16 %v2333
    %v2469 = vunpack.c.l.b16 %v2334
    %v2470 = vunpack.c.l.b16 %v2335
    %v2471 = vunpack.c.l.b16 %v2336
    %v2472 = vunpack.c.l.b16 %v2337
    %v2473 = vunpack.c.l.b16 %v2338
    %v2474 = vunpack.c.l.b16 %v2339
    %v2475 = vunpack.c.l.b16 %v2340
    %v2476 = vunpack.c.l.b16 %v2341
    %v2477 = vunpack.c.l.b16 %v2342
    %v2478 = vunpack.c.l.b16 %v2343
    %v2479 = vunpack.c.l.b16 %v2344
    %v2480 = vunpack.c.l.b16 %v2345
    %v2481 = vunpack.c.l.b16 %v2346
    %v2482 = vunpack.c.l.b16 %v2347
    %v2483 = vunpack.c.l.b16 %v2348
    %v2484 = vunpack.c.l.b16 %v2349
    %v2485 = vunpack.c.l.b16 %v2350
    %v2486 = vunpack.c.l.b16 %v2351
    %v2487 = vunpack.c.l.b16 %v2352
    %v2488 = vunpack.c.l.b16 %v2353
    %v2489 = vunpack.c.l.b16 %v2354
    %v2490 = vunpack.c.l.b16 %v2355
    %v2491 = vunpack.c.l.b16 %v2356
    %v2492 = vunpack.c.l.b16 %v2357
    %v2493 = vunpack.c.l.b16 %v2358
    %v2494 = vunpack.c.l.b16 %v2359
    %v2495 = vunpack.c.l.b16 %v2360
    %v2496 = vunpack.c.l.b16 %v2361
    %v2497 = vunpack.c.l.b16 %v2362
    %v2498 = vunpack.c.l.b16 %v2363
    %v2499 = vunpack.c.l.b16 %v2364
    %v2500 = vunpack.c.l.b16 %v2365
    %v2501 = vunpack.c.l.b16 %v2366
    %v2502 = vunpack.c.l.b16 %v2367
    %v2503 = vunpack.c.l.b16 %v2368
    %v2504 = vunpack.c.l.b16 %v2369
    %v2505 = vunpack.c.l.b16 %v2370
    %v2506 = vunpack.c.l.b16 %v2371
    %v2507 = vunpack.c.l.b16 %v2372
    %v2508 = vunpack.c.l.b16 %v2373
    %v2509 = vunpack.c.l.b16 %v2374
    %v2510 = vunpack.c.l.b16 %v2375
    %v2511 = vunpack.c.l.b16 %v2376
    %v2512 = vunpack.c.l.b16 %v2377
    %v2513 = vpack.c.b16 %v2450, %v2449
    %v2514 = vpack.c.b16 %v2452, %v2451
    %v2515 = vpack.c.b16 %v2454, %v2453
    %v2516 = vpack.c.b16 %v2456, %v2455
    %v2517 = vpack.c.b16 %v2458, %v2457
    %v2518 = vpack.c.b16 %v2460, %v2459
    %v2519 = vpack.c.b16 %v2462, %v2461
    %v2520 = vpack.c.b16 %v2464, %v2463
    %v2521 = vpack.c.b16 %v2466, %v2465
    %v2522 = vpack.c.b16 %v2468, %v2467
    %v2523 = vpack.c.b16 %v2470, %v2469
    %v2524 = vpack.c.b16 %v2472, %v2471
    %v2525 = vpack.c.b16 %v2474, %v2473
    %v2526 = vpack.c.b16 %v2476, %v2475
    %v2527 = vpack.c.b16 %v2478, %v2477
    %v2528 = vpack.c.b16 %v2480, %v2479
    %v2529 = vpack.c.b16 %v2482, %v2481
    %v2530 = vpack.c.b16 %v2484, %v2483
    %v2531 = vpack.c.b16 %v2486, %v2485
    %v2532 = vpack.c.b16 %v2488, %v2487
    %v2533 = vpack.c.b16 %v2490, %v2489
    %v2534 = vpack.c.b16 %v2492, %v2491
    %v2535 = vpack.c.b16 %v2494, %v2493
    %v2536 = vpack.c.b16 %v2496, %v2495
    %v2537 = vpack.c.b16 %v2498, %v2497
    %v2538 = vpack.c.b16 %v2500, %v2499
    %v2539 = vpack.c.b16 %v2502, %v2501
    %v2540 = vpack.c.b16 %v2504, %v2503
    %v2541 = vpack.c.b16 %v2506, %v2505
    %v2542 = vpack.c.b16 %v2508, %v2507
    %v2543 = vpack.c.b16 %v2510, %v2509
    %v2544 = vpack.c.b16 %v2512, %v2511
    %2577 = vmatprep.subr.bf16.mxu0 0
    %2578 = vmatpush1.bf16.msra.mxu0 %v2513
    %2579 = vmatprep.subr.bf16.mxu0 0
    %2580 = vmatpush1.bf16.msra.mxu0 %v2514
    %2581 = vmatprep.subr.bf16.mxu0 0
    %2582 = vmatpush1.bf16.msra.mxu0 %v2515
    %2583 = vmatprep.subr.bf16.mxu0 0
    %2584 = vmatpush1.bf16.msra.mxu0 %v2516
    %2585 = vmatprep.subr.bf16.mxu0 0
    %2586 = vmatpush1.bf16.msra.mxu0 %v2517
    %2587 = vmatprep.subr.bf16.mxu0 0
    %2588 = vmatpush1.bf16.msra.mxu0 %v2518
    %2589 = vmatprep.subr.bf16.mxu0 0
    %2590 = vmatpush1.bf16.msra.mxu0 %v2519
    %2591 = vmatprep.subr.bf16.mxu0 0
    %2592 = vmatpush1.bf16.msra.mxu0 %v2520
    %2593 = vmatprep.subr.bf16.mxu0 0
    %2594 = vmatpush1.bf16.msra.mxu0 %v2521
    %2595 = vmatprep.subr.bf16.mxu0 0
    %2596 = vmatpush1.bf16.msra.mxu0 %v2522
    %2597 = vmatprep.subr.bf16.mxu0 0
    %2598 = vmatpush1.bf16.msra.mxu0 %v2523
    %2599 = vmatprep.subr.bf16.mxu0 0
    %2600 = vmatpush1.bf16.msra.mxu0 %v2524
    %2601 = vmatprep.subr.bf16.mxu0 0
    %2602 = vmatpush1.bf16.msra.mxu0 %v2525
    %2603 = vmatprep.subr.bf16.mxu0 0
    %2604 = vmatpush1.bf16.msra.mxu0 %v2526
    %2605 = vmatprep.subr.bf16.mxu0 0
    %2606 = vmatpush1.bf16.msra.mxu0 %v2527
    %2607 = vmatprep.subr.bf16.mxu0 0
    %2608 = vmatpush1.bf16.msra.mxu0 %v2528
    %2609 = vmatprep.mubr.bf16.mxu0 %v2313
    %2610 = vmatmul.mubr.bf16.gmra.mrb[0].mxu0 %v2312
    %v2611 = vpop.f32.mrb[0].mxu0
    %v2612 = vadd.f32 %v2383, %v2611
    %v2613 = vpop.f32.mrb[0].mxu0
    %v2614 = vpop.f32.mrb[0].mxu0
    %v2615 = vpop.f32.mrb[0].mxu0
    %2616 = vdwg.mxu0
    %2617 = vmatprep.subr.bf16.mxu0 0
    %2618 = vmatpush1.bf16.msra.mxu0 %v2529
    %2619 = vmatprep.subr.bf16.mxu0 0
    %2620 = vmatpush1.bf16.msra.mxu0 %v2530
    %2621 = vmatprep.subr.bf16.mxu0 0
    %2622 = vmatpush1.bf16.msra.mxu0 %v2531
    %2623 = vmatprep.subr.bf16.mxu0 0
    %2624 = vmatpush1.bf16.msra.mxu0 %v2532
    %2625 = vmatprep.subr.bf16.mxu0 0
    %2626 = vmatpush1.bf16.msra.mxu0 %v2533
    %2627 = vmatprep.subr.bf16.mxu0 0
    %2628 = vmatpush1.bf16.msra.mxu0 %v2534
    %2629 = vmatprep.subr.bf16.mxu0 0
    %2630 = vmatpush1.bf16.msra.mxu0 %v2535
    %2631 = vmatprep.subr.bf16.mxu0 0
    %2632 = vmatpush1.bf16.msra.mxu0 %v2536
    %2633 = vmatprep.subr.bf16.mxu0 0
    %2634 = vmatpush1.bf16.msra.mxu0 %v2537
    %2635 = vmatprep.subr.bf16.mxu0 0
    %2636 = vmatpush1.bf16.msra.mxu0 %v2538
    %2637 = vmatprep.subr.bf16.mxu0 0
    %2638 = vmatpush1.bf16.msra.mxu0 %v2539
    %2639 = vmatprep.subr.bf16.mxu0 0
    %2640 = vmatpush1.bf16.msra.mxu0 %v2540
    %2641 = vmatprep.subr.bf16.mxu0 0
    %2642 = vmatpush1.bf16.msra.mxu0 %v2541
    %2643 = vmatprep.subr.bf16.mxu0 0
    %2644 = vmatpush1.bf16.msra.mxu0 %v2542
    %2645 = vmatprep.subr.bf16.mxu0 0
    %2646 = vmatpush1.bf16.msra.mxu0 %v2543
    %2647 = vmatprep.subr.bf16.mxu0 0
    %2648 = vmatpush1.bf16.msra.mxu0 %v2544
    %2649 = vmatprep.mubr.bf16.mxu0 %v1968
    %2650 = vmatmul.mubr.bf16.gmra.mrb[0].mxu0 %v1967
    %v2651 = vpop.f32.mrb[0].mxu0
    %v2652 = vadd.f32 %v2612, %v2651
    %v2653 = vpop.f32.mrb[0].mxu0
    %v2654 = vpop.f32.mrb[0].mxu0
    %v2655 = vpop.f32.mrb[0].mxu0
    %2656 = vdwg.mxu0
    %v2657 = vtanh.pop %v2652
    %vm2658 = vcmask 31744
    %2659 = vst.msk [vmem:[%s14] sm:$0xff] %vm2658, %v2657
    // Predicated region
    $region70: #{tpu_custom_call.1} parent=1 // pred_check
      _
    $region71: #{tpu_custom_call.1} parent=1 // pred_check_branch
      %2661 = sbr.rel (0) target = $region73
    $region72: #{tpu_custom_call.1} parent=1 // pred_region
      _
    $region73: #{tpu_custom_call.1} parent=1 // pred_fallthru
      _
    // Predicated region
    $region74: #{tpu_custom_call.1} parent=1 // pred_check
      _
    $region75: #{tpu_custom_call.1} parent=1 // pred_check_branch
      %2663 = sbr.rel (0) target = $region77
    $region76: #{tpu_custom_call.1} parent=1 // pred_region
      _
    $region77: #{tpu_custom_call.1} parent=1 // pred_fallthru
      _
    %2664 = vsyncpa [#allocation3], 1
    %2665 = vsyncpa [#allocation5], 1

</llo_original>
